<compile_context>
chip_gen: v5e
topology: v5e:2x2
jax: 0.10.0
libtpu: 0.0.40
codegen_flags: <defaults>
</compile_context>

<pallas_src>
import jax
import jax.numpy as jnp
from jax import lax
from jax.experimental import pallas as pl
from jax.experimental.pallas import tpu as pltpu  # noqa: F401  (TPU backend assumed)

# ---- small-model config (consistent with the GPT-2 forward) ----------------
B, S, D, H, V = 2, 8, 32, 2, 128      # batch, seq (== max_length here), hidden, heads, vocab
HD = D // H
MLP = 4 * D                           # == 128, one lane tile
NLAYERS = 2
NEG = -1e9
INV_COUNT = 1.0 / float(B * (S - 1))  # mean over the B*(S-1) shifted positions


# ---- shared math ------------------------------------------------------------
def _layernorm(x, g, b, eps=1e-5):
    mu = jnp.mean(x, axis=-1, keepdims=True)
    var = jnp.mean((x - mu) ** 2, axis=-1, keepdims=True)
    return (x - mu) * lax.rsqrt(var + eps) * g + b


def _gelu(x):
    # GPT-2 "gelu_new" (tanh approximation)
    return 0.5 * x * (1.0 + jnp.tanh(0.7978845608028654 * (x + 0.044715 * x ** 3)))


# ---- one transformer block on the full (B*S, D) activation slab -------------
def _block(x, bias, wqkv, wo, w1, w2, vec):
    # vec rows (lane-padded to MLP): 0 ln1g, 1 ln1b, 2 ln2g, 3 ln2b, 4 bo, 5 b2,
    #                                6 bqkv (first 3D lanes), 7 b1 (full MLP).
    ln1g, ln1b = vec[0:1, :D], vec[1:2, :D]
    ln2g, ln2b = vec[2:3, :D], vec[3:4, :D]
    bo, b2 = vec[4:5, :D], vec[5:6, :D]
    bqkv = vec[6:7, :3 * D]
    b1 = vec[7:8, :]

    h = _layernorm(x, ln1g, ln1b)                                         # (B*S, D)
    qkv = jnp.dot(h, wqkv, preferred_element_type=jnp.float32) + bqkv     # (B*S, 3D)
    qkv3 = qkv.reshape(B, S, 3 * D)                                       # leading-dim split only

    scale = 1.0 / (HD ** 0.5)
    attn = jnp.zeros((B * S, D), jnp.float32)
    for hi in range(H):                                                   # static head loop
        qh = qkv3[:, :, hi * HD:(hi + 1) * HD]                            # (B, S, HD)
        kh = qkv3[:, :, D + hi * HD:D + (hi + 1) * HD]
        vh = qkv3[:, :, 2 * D + hi * HD:2 * D + (hi + 1) * HD]
        s = jnp.einsum("bqd,bkd->bqk", qh, kh,
                       preferred_element_type=jnp.float32) * scale + bias  # (B, S, S)
        s = s - jnp.max(s, axis=-1, keepdims=True)
        p = jnp.exp(s)
        p = p * pl.reciprocal(jnp.sum(p, axis=-1, keepdims=True), approx=True)
        ctx = jnp.einsum("bqk,bkd->bqd", p, vh,
                         preferred_element_type=jnp.float32)               # (B, S, HD)
        # accumulate through W_o per head -> no lane concat of heads
        attn = attn + jnp.dot(ctx.reshape(B * S, HD),
                              wo[hi * HD:(hi + 1) * HD, :],
                              preferred_element_type=jnp.float32)
    x = x + attn + bo

    h2 = _layernorm(x, ln2g, ln2b)
    m = _gelu(jnp.dot(h2, w1, preferred_element_type=jnp.float32) + b1)
    x = x + jnp.dot(m, w2, preferred_element_type=jnp.float32) + b2
    return x


# ---- fused forward kernel: all layers + final LN + logits + CE + exp ---------
def fused_kernel(x_ref, bias_ref, labels_ref,
                 wqkv_ref, wo_ref, w1_ref, w2_ref, vec_ref,
                 lnf_ref, wte_t_ref, out_ref):
    x = x_ref[...]                                                        # (B*S, D) f32
    bias = bias_ref[...]                                                  # (B, S, S) f32

    for li in range(NLAYERS):                                             # static layer loop
        x = _block(x, bias,
                   wqkv_ref[li], wo_ref[li], w1_ref[li], w2_ref[li], vec_ref[li])

    # final LN + tied-embedding logits
    lnf = lnf_ref[...]                                                    # (2, D): g, b
    h = _layernorm(x, lnf[0:1, :], lnf[1:2, :])
    logits = jnp.dot(h, wte_t_ref[...], preferred_element_type=jnp.float32)  # (B*S, V)

    # shifted cross-entropy (position t predicts token t+1); invalid rows have label -1
    mx = jnp.max(logits, axis=-1, keepdims=True)
    lse = mx + jnp.log(jnp.sum(jnp.exp(logits - mx), axis=-1, keepdims=True))  # (B*S, 1)
    lab = labels_ref[...]                                                 # (B*S, 1) int32
    valid = (lab >= 0).astype(jnp.float32)
    vocab_iota = lax.broadcasted_iota(jnp.int32, (B * S, V), 1)
    onehot = (vocab_iota == lab).astype(jnp.float32)
    picked = jnp.sum(logits * onehot, axis=-1, keepdims=True)             # (B*S, 1)
    nll = (lse - picked) * valid                                          # (B*S, 1)

    # ppl = exp(mean loss)
    out_ref[...] = jnp.exp(jnp.sum(nll, keepdims=True) * INV_COUNT)       # (1, 1)


# ---- wrapper ------------------------------------------------------------------
def _pad_lane(v, width):
    return jnp.pad(v, ((0, 0), (0, width - v.shape[-1])))


def gpt2_ppl_forward(params, input_ids, input_masks, segment_ids):
    """Reproduces GPT2PPLExporter.forward: loss = LM(ids, mask, seg, labels=ids); ppl=exp(loss)."""
    wte, wpe = params["wte"], params["wpe"]
    # embedding lookups are host-side glue
    x0 = (wte[input_ids] + wpe[jnp.arange(S)][None, :, :] + wte[segment_ids]).astype(jnp.float32)
    x0 = x0.reshape(B * S, D)

    # combined additive attention bias (causal + key padding), precomputed once
    row = jnp.arange(S)[:, None]
    col = jnp.arange(S)[None, :]
    causal = jnp.where(col <= row, 0.0, NEG).astype(jnp.float32)            # (S, S)
    key_bias = ((1.0 - input_masks.astype(jnp.float32)) * NEG)[:, None, :]  # (B, 1, S)
    bias = causal[None, :, :] + key_bias                                    # (B, S, S)

    # shifted labels (pos t -> token t+1); last position per batch marked invalid (-1)
    shifted = jnp.concatenate([input_ids[:, 1:], jnp.full((B, 1), -1, jnp.int32)], axis=1)
    labels = shifted.reshape(B * S, 1).astype(jnp.int32)

    # pack + stack per-layer params
    wqkv_l, wo_l, w1_l, w2_l, vec_l = [], [], [], [], []
    for (ln1g, ln1b, wq, bq, wk, bk, wv, bv, wo, bo,
         ln2g, ln2b, w1, b1, w2, b2) in params["blocks"]:
        wqkv_l.append(jnp.concatenate([wq, wk, wv], axis=1))                # (D, 3D)
        wo_l.append(wo)
        w1_l.append(w1)
        w2_l.append(w2)
        bqkv = jnp.concatenate([bq, bk, bv], axis=1)                        # (1, 3D)
        vec_l.append(jnp.concatenate(
            [_pad_lane(ln1g, MLP), _pad_lane(ln1b, MLP),
             _pad_lane(ln2g, MLP), _pad_lane(ln2b, MLP),
             _pad_lane(bo, MLP), _pad_lane(b2, MLP),
             _pad_lane(bqkv, MLP), b1], axis=0))                            # (8, MLP)

    wqkv_all = jnp.stack(wqkv_l)                                            # (L, D, 3D)
    wo_all = jnp.stack(wo_l)                                                # (L, D, D)
    w1_all = jnp.stack(w1_l)                                                # (L, D, MLP)
    w2_all = jnp.stack(w2_l)                                                # (L, MLP, D)
    vec_all = jnp.stack(vec_l)                                              # (L, 8, MLP)

    lnf = jnp.concatenate([params["lnf_g"], params["lnf_b"]], axis=0)       # (2, D)

    # single pallas_call, single grid step: everything fits comfortably in VMEM
    out = pl.pallas_call(
        fused_kernel,
        out_shape=jax.ShapeDtypeStruct((1, 1), jnp.float32),
    )(x0, bias, labels, wqkv_all, wo_all, w1_all, w2_all, vec_all, lnf, params["wte_t"])
    return out[0, 0]


# ---- pure-JAX reference (for correctness check) ------------------------------
def reference_forward(params, input_ids, input_masks, segment_ids):
    wte, wpe = params["wte"], params["wpe"]
    x = wte[input_ids] + wpe[jnp.arange(S)][None, :, :] + wte[segment_ids]
    x = x.astype(jnp.float32)
    key_bias = ((1.0 - input_masks.astype(jnp.float32)) * NEG)[:, None, :]
    row = jnp.arange(S)[:, None]
    col = jnp.arange(S)[None, :]
    causal = jnp.where(col <= row, 0.0, NEG)
    for (ln1g, ln1b, wq, bq, wk, bk, wv, bv, wo, bo,
         ln2g, ln2b, w1, b1, w2, b2) in params["blocks"]:
        h = _layernorm(x, ln1g, ln1b)
        q = h @ wq + bq
        k = h @ wk + bk
        v = h @ wv + bv
        heads = []
        for hi in range(H):
            qh = q[:, :, hi * HD:(hi + 1) * HD]
            kh = k[:, :, hi * HD:(hi + 1) * HD]
            vh = v[:, :, hi * HD:(hi + 1) * HD]
            s = jnp.einsum("bqd,bkd->bqk", qh, kh) / (HD ** 0.5)
            s = s + causal[None] + key_bias
            p = jax.nn.softmax(s, axis=-1)
            heads.append(jnp.einsum("bqk,bkd->bqd", p, vh))
        attn = jnp.concatenate(heads, axis=-1) @ wo + bo
        x = x + attn
        h2 = _layernorm(x, ln2g, ln2b)
        x = x + (_gelu(h2 @ w1 + b1) @ w2 + b2)
    h = _layernorm(x, params["lnf_g"], params["lnf_b"])
    logits = h @ params["wte_t"]                     # (B, S, V)
    shift_logits = logits[:, :-1, :]
    shift_labels = input_ids[:, 1:]
    lse = jax.nn.logsumexp(shift_logits, axis=-1)
    picked = jnp.take_along_axis(shift_logits, shift_labels[..., None], axis=-1)[..., 0]
    loss = jnp.mean(lse - picked)
    return jnp.exp(loss)


# ---- deterministic parameter init --------------------------------------------
def init_params(key):
    def nrm(k, shape, scale=0.02):
        return (scale * jax.random.normal(k, shape)).astype(jnp.float32)

    keys = jax.random.split(key, 2 + 8 * NLAYERS)
    wte = nrm(keys[0], (V, D))
    wpe = nrm(keys[1], (S, D))
    blocks = []
    ki = 2
    for _ in range(NLAYERS):
        wq = nrm(keys[ki + 0], (D, D)); wk = nrm(keys[ki + 1], (D, D))
        wv = nrm(keys[ki + 2], (D, D)); wo = nrm(keys[ki + 3], (D, D))
        w1 = nrm(keys[ki + 4], (D, MLP)); w2 = nrm(keys[ki + 5], (MLP, D))
        ki += 8
        blocks.append((
            jnp.ones((1, D), jnp.float32), jnp.zeros((1, D), jnp.float32),   # ln1
            wq, jnp.zeros((1, D), jnp.float32),
            wk, jnp.zeros((1, D), jnp.float32),
            wv, jnp.zeros((1, D), jnp.float32),
            wo, jnp.zeros((1, D), jnp.float32),
            jnp.ones((1, D), jnp.float32), jnp.zeros((1, D), jnp.float32),   # ln2
            w1, jnp.zeros((1, MLP), jnp.float32),
            w2, jnp.zeros((1, D), jnp.float32),
        ))
    return {"wte": wte, "wpe": wpe, "wte_t": wte.T,   # tied LM head, (D, V)
            "lnf_g": jnp.ones((1, D), jnp.float32),
            "lnf_b": jnp.zeros((1, D), jnp.float32),
            "blocks": blocks}


# ---- main ---------------------------------------------------------------------
if __name__ == "__main__":
    root = jax.random.PRNGKey(0)
    k_param, k_ids = jax.random.split(root)

    params = init_params(k_param)

    # synthesized "preprocessor" outputs: ids, attention masks, segment ids
    input_ids = jax.random.randint(k_ids, (B, S), 0, V, dtype=jnp.int32)
    input_masks = jnp.array([[1, 1, 1, 1, 1, 1, 1, 1],
                             [1, 1, 1, 1, 1, 1, 0, 0]], dtype=jnp.int32)
    segment_ids = jnp.zeros((B, S), dtype=jnp.int32)

    ppl = gpt2_ppl_forward(params, input_ids, input_masks, segment_ids)
    ppl = jax.block_until_ready(ppl)

    ppl_ref = reference_forward(params, input_ids, input_masks, segment_ids)
    assert jnp.isfinite(ppl), "non-finite perplexity"
    assert jnp.allclose(ppl, ppl_ref, rtol=2e-2, atol=1e-2), (ppl, ppl_ref)

    print("KERNEL_OK")
</pallas_src>

<mosaic_0001>
module attributes {stable_mosaic.version = 11 : i64} {
  func.func @fused_kernel(%arg0: memref<16x32xf32, #tpu.memory_space<vmem>>, %arg1: memref<2x8x8xf32, #tpu.memory_space<vmem>>, %arg2: memref<16x1xi32, #tpu.memory_space<vmem>>, %arg3: memref<2x32x96xf32, #tpu.memory_space<vmem>>, %arg4: memref<2x32x32xf32, #tpu.memory_space<vmem>>, %arg5: memref<2x32x128xf32, #tpu.memory_space<vmem>>, %arg6: memref<2x128x32xf32, #tpu.memory_space<vmem>>, %arg7: memref<2x8x128xf32, #tpu.memory_space<vmem>>, %arg8: memref<2x32xf32, #tpu.memory_space<vmem>>, %arg9: memref<32x128xf32, #tpu.memory_space<vmem>>, %arg10: memref<1x1xf32, #tpu.memory_space<vmem>>) attributes {dimension_semantics = [], scalar_prefetch = 0 : i64, scratch_operands = 0 : i64, tpu.core_type = #tpu.core_type<tc>} {
    %c0 = arith.constant 0 : index
    %c0_0 = arith.constant 0 : index
    %0 = vector.load %arg0[%c0, %c0_0] : memref<16x32xf32, #tpu.memory_space<vmem>>, vector<16x32xf32>
    %c0_1 = arith.constant 0 : index
    %c0_2 = arith.constant 0 : index
    %c0_3 = arith.constant 0 : index
    %1 = vector.load %arg1[%c0_1, %c0_2, %c0_3] : memref<2x8x8xf32, #tpu.memory_space<vmem>>, vector<2x8x8xf32>
    %c0_4 = arith.constant 0 : index
    %c0_5 = arith.constant 0 : index
    %c0_6 = arith.constant 0 : index
    %2 = vector.load %arg3[%c0_4, %c0_5, %c0_6] : memref<2x32x96xf32, #tpu.memory_space<vmem>>, vector<1x32x96xf32>
    %3 = vector.shape_cast %2 : vector<1x32x96xf32> to vector<32x96xf32>
    %c0_7 = arith.constant 0 : index
    %c0_8 = arith.constant 0 : index
    %c0_9 = arith.constant 0 : index
    %4 = vector.load %arg4[%c0_7, %c0_8, %c0_9] : memref<2x32x32xf32, #tpu.memory_space<vmem>>, vector<1x32x32xf32>
    %5 = vector.shape_cast %4 : vector<1x32x32xf32> to vector<32x32xf32>
    %c0_10 = arith.constant 0 : index
    %c0_11 = arith.constant 0 : index
    %c0_12 = arith.constant 0 : index
    %6 = vector.load %arg5[%c0_10, %c0_11, %c0_12] : memref<2x32x128xf32, #tpu.memory_space<vmem>>, vector<1x32x128xf32>
    %7 = vector.shape_cast %6 : vector<1x32x128xf32> to vector<32x128xf32>
    %c0_13 = arith.constant 0 : index
    %c0_14 = arith.constant 0 : index
    %c0_15 = arith.constant 0 : index
    %8 = vector.load %arg6[%c0_13, %c0_14, %c0_15] : memref<2x128x32xf32, #tpu.memory_space<vmem>>, vector<1x128x32xf32>
    %9 = vector.shape_cast %8 : vector<1x128x32xf32> to vector<128x32xf32>
    %c0_16 = arith.constant 0 : index
    %c0_17 = arith.constant 0 : index
    %c0_18 = arith.constant 0 : index
    %10 = vector.load %arg7[%c0_16, %c0_17, %c0_18] : memref<2x8x128xf32, #tpu.memory_space<vmem>>, vector<1x8x128xf32>
    %11 = vector.shape_cast %10 : vector<1x8x128xf32> to vector<8x128xf32>
    %12 = vector.extract_strided_slice %11 {offsets = [0, 0], sizes = [1, 32], strides = [1, 1]} : vector<8x128xf32> to vector<1x32xf32>
    %13 = vector.extract_strided_slice %11 {offsets = [1, 0], sizes = [1, 32], strides = [1, 1]} : vector<8x128xf32> to vector<1x32xf32>
    %14 = vector.extract_strided_slice %11 {offsets = [2, 0], sizes = [1, 32], strides = [1, 1]} : vector<8x128xf32> to vector<1x32xf32>
    %15 = vector.extract_strided_slice %11 {offsets = [3, 0], sizes = [1, 32], strides = [1, 1]} : vector<8x128xf32> to vector<1x32xf32>
    %16 = vector.extract_strided_slice %11 {offsets = [4, 0], sizes = [1, 32], strides = [1, 1]} : vector<8x128xf32> to vector<1x32xf32>
    %17 = vector.extract_strided_slice %11 {offsets = [5, 0], sizes = [1, 32], strides = [1, 1]} : vector<8x128xf32> to vector<1x32xf32>
    %18 = vector.extract_strided_slice %11 {offsets = [6, 0], sizes = [1, 96], strides = [1, 1]} : vector<8x128xf32> to vector<1x96xf32>
    %19 = vector.extract_strided_slice %11 {offsets = [7, 0], sizes = [1, 128], strides = [1, 1]} : vector<8x128xf32> to vector<1x128xf32>
    %cst = arith.constant dense<0.000000e+00> : vector<16xf32>
    %20 = vector.multi_reduction <add>, %0, %cst [1] : vector<16x32xf32> to vector<16xf32>
    %21 = vector.shape_cast %20 : vector<16xf32> to vector<16x1xf32>
    %cst_19 = arith.constant 3.200000e+01 : f32
    %22 = vector.broadcast %cst_19 : f32 to vector<16x1xf32>
    %23 = arith.divf %21, %22 : vector<16x1xf32>
    %24 = vector.broadcast %23 : vector<16x1xf32> to vector<16x32xf32>
    %25 = arith.subf %0, %24 : vector<16x32xf32>
    %26 = arith.mulf %25, %25 : vector<16x32xf32>
    %cst_20 = arith.constant dense<0.000000e+00> : vector<16xf32>
    %27 = vector.multi_reduction <add>, %26, %cst_20 [1] : vector<16x32xf32> to vector<16xf32>
    %28 = vector.shape_cast %27 : vector<16xf32> to vector<16x1xf32>
    %cst_21 = arith.constant 3.200000e+01 : f32
    %29 = vector.broadcast %cst_21 : f32 to vector<16x1xf32>
    %30 = arith.divf %28, %29 : vector<16x1xf32>
    %31 = vector.broadcast %23 : vector<16x1xf32> to vector<16x32xf32>
    %32 = arith.subf %0, %31 : vector<16x32xf32>
    %cst_22 = arith.constant 9.99999974E-6 : f32
    %33 = vector.broadcast %cst_22 : f32 to vector<16x1xf32>
    %34 = arith.addf %30, %33 : vector<16x1xf32>
    %35 = math.rsqrt %34 : vector<16x1xf32>
    %36 = vector.broadcast %35 : vector<16x1xf32> to vector<16x32xf32>
    %37 = arith.mulf %32, %36 : vector<16x32xf32>
    %38 = vector.broadcast %12 : vector<1x32xf32> to vector<16x32xf32>
    %39 = arith.mulf %37, %38 : vector<16x32xf32>
    %40 = vector.broadcast %13 : vector<1x32xf32> to vector<16x32xf32>
    %41 = arith.addf %39, %40 : vector<16x32xf32>
    %cst_23 = arith.constant dense<0.000000e+00> : vector<16x96xf32>
    %42 = tpu.matmul %41, %3, %cst_23 {dimension_numbers = #tpu.dot_dimension_numbers<[1], [0], [0], [1], [0, 0, 1, 1], [], []>} : vector<16x32xf32>, vector<32x96xf32>, vector<16x96xf32> -> vector<16x96xf32>
    %43 = vector.broadcast %18 : vector<1x96xf32> to vector<16x96xf32>
    %44 = arith.addf %42, %43 : vector<16x96xf32>
    %45 = vector.shape_cast %44 : vector<16x96xf32> to vector<2x8x96xf32>
    %cst_24 = arith.constant 0.000000e+00 : f32
    %46 = vector.broadcast %cst_24 : f32 to vector<16x32xf32>
    %47 = vector.extract_strided_slice %45 {offsets = [0, 0, 0], sizes = [2, 8, 16], strides = [1, 1, 1]} : vector<2x8x96xf32> to vector<2x8x16xf32>
    %48 = vector.extract_strided_slice %45 {offsets = [0, 0, 32], sizes = [2, 8, 16], strides = [1, 1, 1]} : vector<2x8x96xf32> to vector<2x8x16xf32>
    %49 = vector.extract_strided_slice %45 {offsets = [0, 0, 64], sizes = [2, 8, 16], strides = [1, 1, 1]} : vector<2x8x96xf32> to vector<2x8x16xf32>
    "tpu.trace_start"() <{level = 10 : i32, message = "bqd,bkd->bqk"}> : () -> ()
    %cst_25 = arith.constant dense<0.000000e+00> : vector<2x8x8xf32>
    %50 = tpu.matmul %47, %48, %cst_25 {dimension_numbers = #tpu.dot_dimension_numbers<[2], [2], [1], [1], [0, 0, 0, 1, 1, 1], [0], [0]>} : vector<2x8x16xf32>, vector<2x8x16xf32>, vector<2x8x8xf32> -> vector<2x8x8xf32>
    "tpu.trace_stop"() : () -> ()
    %cst_26 = arith.constant 2.500000e-01 : f32
    %51 = vector.broadcast %cst_26 : f32 to vector<2x8x8xf32>
    %52 = arith.mulf %50, %51 : vector<2x8x8xf32>
    %53 = arith.addf %52, %1 : vector<2x8x8xf32>
    %cst_27 = arith.constant dense<0xFF800000> : vector<2x8xf32>
    %54 = vector.multi_reduction <maximumf>, %53, %cst_27 [2] : vector<2x8x8xf32> to vector<2x8xf32>
    %55 = vector.shape_cast %54 : vector<2x8xf32> to vector<2x8x1xf32>
    %56 = vector.broadcast %55 : vector<2x8x1xf32> to vector<2x8x8xf32>
    %57 = arith.subf %53, %56 : vector<2x8x8xf32>
    %58 = math.exp %57 : vector<2x8x8xf32>
    %cst_28 = arith.constant dense<0.000000e+00> : vector<2x8xf32>
    %59 = vector.multi_reduction <add>, %58, %cst_28 [2] : vector<2x8x8xf32> to vector<2x8xf32>
    %60 = vector.shape_cast %59 : vector<2x8xf32> to vector<2x8x1xf32>
    %61 = tpu.reciprocal %60 {approx = true} : vector<2x8x1xf32> -> vector<2x8x1xf32>
    %62 = vector.broadcast %61 : vector<2x8x1xf32> to vector<2x8x8xf32>
    %63 = arith.mulf %58, %62 : vector<2x8x8xf32>
    "tpu.trace_start"() <{level = 10 : i32, message = "bqk,bkd->bqd"}> : () -> ()
    %cst_29 = arith.constant dense<0.000000e+00> : vector<2x8x16xf32>
    %64 = tpu.matmul %63, %49, %cst_29 {dimension_numbers = #tpu.dot_dimension_numbers<[2], [1], [1], [2], [0, 0, 0, 1, 1, 2], [0], [0]>} : vector<2x8x8xf32>, vector<2x8x16xf32>, vector<2x8x16xf32> -> vector<2x8x16xf32>
    "tpu.trace_stop"() : () -> ()
    %65 = vector.shape_cast %64 : vector<2x8x16xf32> to vector<16x16xf32>
    %66 = vector.extract_strided_slice %5 {offsets = [0, 0], sizes = [16, 32], strides = [1, 1]} : vector<32x32xf32> to vector<16x32xf32>
    %cst_30 = arith.constant dense<0.000000e+00> : vector<16x32xf32>
    %67 = tpu.matmul %65, %66, %cst_30 {dimension_numbers = #tpu.dot_dimension_numbers<[1], [0], [0], [1], [0, 0, 1, 1], [], []>} : vector<16x16xf32>, vector<16x32xf32>, vector<16x32xf32> -> vector<16x32xf32>
    %68 = arith.addf %46, %67 : vector<16x32xf32>
    %69 = vector.extract_strided_slice %45 {offsets = [0, 0, 16], sizes = [2, 8, 16], strides = [1, 1, 1]} : vector<2x8x96xf32> to vector<2x8x16xf32>
    %70 = vector.extract_strided_slice %45 {offsets = [0, 0, 48], sizes = [2, 8, 16], strides = [1, 1, 1]} : vector<2x8x96xf32> to vector<2x8x16xf32>
    %71 = vector.extract_strided_slice %45 {offsets = [0, 0, 80], sizes = [2, 8, 16], strides = [1, 1, 1]} : vector<2x8x96xf32> to vector<2x8x16xf32>
    "tpu.trace_start"() <{level = 10 : i32, message = "bqd,bkd->bqk"}> : () -> ()
    %cst_31 = arith.constant dense<0.000000e+00> : vector<2x8x8xf32>
    %72 = tpu.matmul %69, %70, %cst_31 {dimension_numbers = #tpu.dot_dimension_numbers<[2], [2], [1], [1], [0, 0, 0, 1, 1, 1], [0], [0]>} : vector<2x8x16xf32>, vector<2x8x16xf32>, vector<2x8x8xf32> -> vector<2x8x8xf32>
    "tpu.trace_stop"() : () -> ()
    %cst_32 = arith.constant 2.500000e-01 : f32
    %73 = vector.broadcast %cst_32 : f32 to vector<2x8x8xf32>
    %74 = arith.mulf %72, %73 : vector<2x8x8xf32>
    %75 = arith.addf %74, %1 : vector<2x8x8xf32>
    %cst_33 = arith.constant dense<0xFF800000> : vector<2x8xf32>
    %76 = vector.multi_reduction <maximumf>, %75, %cst_33 [2] : vector<2x8x8xf32> to vector<2x8xf32>
    %77 = vector.shape_cast %76 : vector<2x8xf32> to vector<2x8x1xf32>
    %78 = vector.broadcast %77 : vector<2x8x1xf32> to vector<2x8x8xf32>
    %79 = arith.subf %75, %78 : vector<2x8x8xf32>
    %80 = math.exp %79 : vector<2x8x8xf32>
    %cst_34 = arith.constant dense<0.000000e+00> : vector<2x8xf32>
    %81 = vector.multi_reduction <add>, %80, %cst_34 [2] : vector<2x8x8xf32> to vector<2x8xf32>
    %82 = vector.shape_cast %81 : vector<2x8xf32> to vector<2x8x1xf32>
    %83 = tpu.reciprocal %82 {approx = true} : vector<2x8x1xf32> -> vector<2x8x1xf32>
    %84 = vector.broadcast %83 : vector<2x8x1xf32> to vector<2x8x8xf32>
    %85 = arith.mulf %80, %84 : vector<2x8x8xf32>
    "tpu.trace_start"() <{level = 10 : i32, message = "bqk,bkd->bqd"}> : () -> ()
    %cst_35 = arith.constant dense<0.000000e+00> : vector<2x8x16xf32>
    %86 = tpu.matmul %85, %71, %cst_35 {dimension_numbers = #tpu.dot_dimension_numbers<[2], [1], [1], [2], [0, 0, 0, 1, 1, 2], [0], [0]>} : vector<2x8x8xf32>, vector<2x8x16xf32>, vector<2x8x16xf32> -> vector<2x8x16xf32>
    "tpu.trace_stop"() : () -> ()
    %87 = vector.shape_cast %86 : vector<2x8x16xf32> to vector<16x16xf32>
    %88 = vector.extract_strided_slice %5 {offsets = [16, 0], sizes = [16, 32], strides = [1, 1]} : vector<32x32xf32> to vector<16x32xf32>
    %cst_36 = arith.constant dense<0.000000e+00> : vector<16x32xf32>
    %89 = tpu.matmul %87, %88, %cst_36 {dimension_numbers = #tpu.dot_dimension_numbers<[1], [0], [0], [1], [0, 0, 1, 1], [], []>} : vector<16x16xf32>, vector<16x32xf32>, vector<16x32xf32> -> vector<16x32xf32>
    %90 = arith.addf %68, %89 : vector<16x32xf32>
    %91 = arith.addf %0, %90 : vector<16x32xf32>
    %92 = vector.broadcast %16 : vector<1x32xf32> to vector<16x32xf32>
    %93 = arith.addf %91, %92 : vector<16x32xf32>
    %cst_37 = arith.constant dense<0.000000e+00> : vector<16xf32>
    %94 = vector.multi_reduction <add>, %93, %cst_37 [1] : vector<16x32xf32> to vector<16xf32>
    %95 = vector.shape_cast %94 : vector<16xf32> to vector<16x1xf32>
    %cst_38 = arith.constant 3.200000e+01 : f32
    %96 = vector.broadcast %cst_38 : f32 to vector<16x1xf32>
    %97 = arith.divf %95, %96 : vector<16x1xf32>
    %98 = vector.broadcast %97 : vector<16x1xf32> to vector<16x32xf32>
    %99 = arith.subf %93, %98 : vector<16x32xf32>
    %100 = arith.mulf %99, %99 : vector<16x32xf32>
    %cst_39 = arith.constant dense<0.000000e+00> : vector<16xf32>
    %101 = vector.multi_reduction <add>, %100, %cst_39 [1] : vector<16x32xf32> to vector<16xf32>
    %102 = vector.shape_cast %101 : vector<16xf32> to vector<16x1xf32>
    %cst_40 = arith.constant 3.200000e+01 : f32
    %103 = vector.broadcast %cst_40 : f32 to vector<16x1xf32>
    %104 = arith.divf %102, %103 : vector<16x1xf32>
    %105 = vector.broadcast %97 : vector<16x1xf32> to vector<16x32xf32>
    %106 = arith.subf %93, %105 : vector<16x32xf32>
    %cst_41 = arith.constant 9.99999974E-6 : f32
    %107 = vector.broadcast %cst_41 : f32 to vector<16x1xf32>
    %108 = arith.addf %104, %107 : vector<16x1xf32>
    %109 = math.rsqrt %108 : vector<16x1xf32>
    %110 = vector.broadcast %109 : vector<16x1xf32> to vector<16x32xf32>
    %111 = arith.mulf %106, %110 : vector<16x32xf32>
    %112 = vector.broadcast %14 : vector<1x32xf32> to vector<16x32xf32>
    %113 = arith.mulf %111, %112 : vector<16x32xf32>
    %114 = vector.broadcast %15 : vector<1x32xf32> to vector<16x32xf32>
    %115 = arith.addf %113, %114 : vector<16x32xf32>
    %cst_42 = arith.constant dense<0.000000e+00> : vector<16x128xf32>
    %116 = tpu.matmul %115, %7, %cst_42 {dimension_numbers = #tpu.dot_dimension_numbers<[1], [0], [0], [1], [0, 0, 1, 1], [], []>} : vector<16x32xf32>, vector<32x128xf32>, vector<16x128xf32> -> vector<16x128xf32>
    %117 = vector.broadcast %19 : vector<1x128xf32> to vector<16x128xf32>
    %118 = arith.addf %116, %117 : vector<16x128xf32>
    %cst_43 = arith.constant 5.000000e-01 : f32
    %119 = vector.broadcast %cst_43 : f32 to vector<16x128xf32>
    %120 = arith.mulf %119, %118 : vector<16x128xf32>
    %121 = arith.mulf %118, %118 : vector<16x128xf32>
    %122 = arith.mulf %118, %121 : vector<16x128xf32>
    %cst_44 = arith.constant 4.471500e-02 : f32
    %123 = vector.broadcast %cst_44 : f32 to vector<16x128xf32>
    %124 = arith.mulf %123, %122 : vector<16x128xf32>
    %125 = arith.addf %118, %124 : vector<16x128xf32>
    %cst_45 = arith.constant 0.797884583 : f32
    %126 = vector.broadcast %cst_45 : f32 to vector<16x128xf32>
    %127 = arith.mulf %126, %125 : vector<16x128xf32>
    %128 = math.tanh %127 : vector<16x128xf32>
    %cst_46 = arith.constant 1.000000e+00 : f32
    %129 = vector.broadcast %cst_46 : f32 to vector<16x128xf32>
    %130 = arith.addf %129, %128 : vector<16x128xf32>
    %131 = arith.mulf %120, %130 : vector<16x128xf32>
    %cst_47 = arith.constant dense<0.000000e+00> : vector<16x32xf32>
    %132 = tpu.matmul %131, %9, %cst_47 {dimension_numbers = #tpu.dot_dimension_numbers<[1], [0], [0], [1], [0, 0, 1, 1], [], []>} : vector<16x128xf32>, vector<128x32xf32>, vector<16x32xf32> -> vector<16x32xf32>
    %133 = arith.addf %93, %132 : vector<16x32xf32>
    %134 = vector.broadcast %17 : vector<1x32xf32> to vector<16x32xf32>
    %135 = arith.addf %133, %134 : vector<16x32xf32>
    %c1 = arith.constant 1 : index
    %c0_48 = arith.constant 0 : index
    %c0_49 = arith.constant 0 : index
    %136 = vector.load %arg3[%c1, %c0_48, %c0_49] : memref<2x32x96xf32, #tpu.memory_space<vmem>>, vector<1x32x96xf32>
    %137 = vector.shape_cast %136 : vector<1x32x96xf32> to vector<32x96xf32>
    %c1_50 = arith.constant 1 : index
    %c0_51 = arith.constant 0 : index
    %c0_52 = arith.constant 0 : index
    %138 = vector.load %arg4[%c1_50, %c0_51, %c0_52] : memref<2x32x32xf32, #tpu.memory_space<vmem>>, vector<1x32x32xf32>
    %139 = vector.shape_cast %138 : vector<1x32x32xf32> to vector<32x32xf32>
    %c1_53 = arith.constant 1 : index
    %c0_54 = arith.constant 0 : index
    %c0_55 = arith.constant 0 : index
    %140 = vector.load %arg5[%c1_53, %c0_54, %c0_55] : memref<2x32x128xf32, #tpu.memory_space<vmem>>, vector<1x32x128xf32>
    %141 = vector.shape_cast %140 : vector<1x32x128xf32> to vector<32x128xf32>
    %c1_56 = arith.constant 1 : index
    %c0_57 = arith.constant 0 : index
    %c0_58 = arith.constant 0 : index
    %142 = vector.load %arg6[%c1_56, %c0_57, %c0_58] : memref<2x128x32xf32, #tpu.memory_space<vmem>>, vector<1x128x32xf32>
    %143 = vector.shape_cast %142 : vector<1x128x32xf32> to vector<128x32xf32>
    %c1_59 = arith.constant 1 : index
    %c0_60 = arith.constant 0 : index
    %c0_61 = arith.constant 0 : index
    %144 = vector.load %arg7[%c1_59, %c0_60, %c0_61] : memref<2x8x128xf32, #tpu.memory_space<vmem>>, vector<1x8x128xf32>
    %145 = vector.shape_cast %144 : vector<1x8x128xf32> to vector<8x128xf32>
    %146 = vector.extract_strided_slice %145 {offsets = [0, 0], sizes = [1, 32], strides = [1, 1]} : vector<8x128xf32> to vector<1x32xf32>
    %147 = vector.extract_strided_slice %145 {offsets = [1, 0], sizes = [1, 32], strides = [1, 1]} : vector<8x128xf32> to vector<1x32xf32>
    %148 = vector.extract_strided_slice %145 {offsets = [2, 0], sizes = [1, 32], strides = [1, 1]} : vector<8x128xf32> to vector<1x32xf32>
    %149 = vector.extract_strided_slice %145 {offsets = [3, 0], sizes = [1, 32], strides = [1, 1]} : vector<8x128xf32> to vector<1x32xf32>
    %150 = vector.extract_strided_slice %145 {offsets = [4, 0], sizes = [1, 32], strides = [1, 1]} : vector<8x128xf32> to vector<1x32xf32>
    %151 = vector.extract_strided_slice %145 {offsets = [5, 0], sizes = [1, 32], strides = [1, 1]} : vector<8x128xf32> to vector<1x32xf32>
    %152 = vector.extract_strided_slice %145 {offsets = [6, 0], sizes = [1, 96], strides = [1, 1]} : vector<8x128xf32> to vector<1x96xf32>
    %153 = vector.extract_strided_slice %145 {offsets = [7, 0], sizes = [1, 128], strides = [1, 1]} : vector<8x128xf32> to vector<1x128xf32>
    %cst_62 = arith.constant dense<0.000000e+00> : vector<16xf32>
    %154 = vector.multi_reduction <add>, %135, %cst_62 [1] : vector<16x32xf32> to vector<16xf32>
    %155 = vector.shape_cast %154 : vector<16xf32> to vector<16x1xf32>
    %cst_63 = arith.constant 3.200000e+01 : f32
    %156 = vector.broadcast %cst_63 : f32 to vector<16x1xf32>
    %157 = arith.divf %155, %156 : vector<16x1xf32>
    %158 = vector.broadcast %157 : vector<16x1xf32> to vector<16x32xf32>
    %159 = arith.subf %135, %158 : vector<16x32xf32>
    %160 = arith.mulf %159, %159 : vector<16x32xf32>
    %cst_64 = arith.constant dense<0.000000e+00> : vector<16xf32>
    %161 = vector.multi_reduction <add>, %160, %cst_64 [1] : vector<16x32xf32> to vector<16xf32>
    %162 = vector.shape_cast %161 : vector<16xf32> to vector<16x1xf32>
    %cst_65 = arith.constant 3.200000e+01 : f32
    %163 = vector.broadcast %cst_65 : f32 to vector<16x1xf32>
    %164 = arith.divf %162, %163 : vector<16x1xf32>
    %165 = vector.broadcast %157 : vector<16x1xf32> to vector<16x32xf32>
    %166 = arith.subf %135, %165 : vector<16x32xf32>
    %cst_66 = arith.constant 9.99999974E-6 : f32
    %167 = vector.broadcast %cst_66 : f32 to vector<16x1xf32>
    %168 = arith.addf %164, %167 : vector<16x1xf32>
    %169 = math.rsqrt %168 : vector<16x1xf32>
    %170 = vector.broadcast %169 : vector<16x1xf32> to vector<16x32xf32>
    %171 = arith.mulf %166, %170 : vector<16x32xf32>
    %172 = vector.broadcast %146 : vector<1x32xf32> to vector<16x32xf32>
    %173 = arith.mulf %171, %172 : vector<16x32xf32>
    %174 = vector.broadcast %147 : vector<1x32xf32> to vector<16x32xf32>
    %175 = arith.addf %173, %174 : vector<16x32xf32>
    %cst_67 = arith.constant dense<0.000000e+00> : vector<16x96xf32>
    %176 = tpu.matmul %175, %137, %cst_67 {dimension_numbers = #tpu.dot_dimension_numbers<[1], [0], [0], [1], [0, 0, 1, 1], [], []>} : vector<16x32xf32>, vector<32x96xf32>, vector<16x96xf32> -> vector<16x96xf32>
    %177 = vector.broadcast %152 : vector<1x96xf32> to vector<16x96xf32>
    %178 = arith.addf %176, %177 : vector<16x96xf32>
    %179 = vector.shape_cast %178 : vector<16x96xf32> to vector<2x8x96xf32>
    %cst_68 = arith.constant 0.000000e+00 : f32
    %180 = vector.broadcast %cst_68 : f32 to vector<16x32xf32>
    %181 = vector.extract_strided_slice %179 {offsets = [0, 0, 0], sizes = [2, 8, 16], strides = [1, 1, 1]} : vector<2x8x96xf32> to vector<2x8x16xf32>
    %182 = vector.extract_strided_slice %179 {offsets = [0, 0, 32], sizes = [2, 8, 16], strides = [1, 1, 1]} : vector<2x8x96xf32> to vector<2x8x16xf32>
    %183 = vector.extract_strided_slice %179 {offsets = [0, 0, 64], sizes = [2, 8, 16], strides = [1, 1, 1]} : vector<2x8x96xf32> to vector<2x8x16xf32>
    "tpu.trace_start"() <{level = 10 : i32, message = "bqd,bkd->bqk"}> : () -> ()
    %cst_69 = arith.constant dense<0.000000e+00> : vector<2x8x8xf32>
    %184 = tpu.matmul %181, %182, %cst_69 {dimension_numbers = #tpu.dot_dimension_numbers<[2], [2], [1], [1], [0, 0, 0, 1, 1, 1], [0], [0]>} : vector<2x8x16xf32>, vector<2x8x16xf32>, vector<2x8x8xf32> -> vector<2x8x8xf32>
    "tpu.trace_stop"() : () -> ()
    %cst_70 = arith.constant 2.500000e-01 : f32
    %185 = vector.broadcast %cst_70 : f32 to vector<2x8x8xf32>
    %186 = arith.mulf %184, %185 : vector<2x8x8xf32>
    %187 = arith.addf %186, %1 : vector<2x8x8xf32>
    %cst_71 = arith.constant dense<0xFF800000> : vector<2x8xf32>
    %188 = vector.multi_reduction <maximumf>, %187, %cst_71 [2] : vector<2x8x8xf32> to vector<2x8xf32>
    %189 = vector.shape_cast %188 : vector<2x8xf32> to vector<2x8x1xf32>
    %190 = vector.broadcast %189 : vector<2x8x1xf32> to vector<2x8x8xf32>
    %191 = arith.subf %187, %190 : vector<2x8x8xf32>
    %192 = math.exp %191 : vector<2x8x8xf32>
    %cst_72 = arith.constant dense<0.000000e+00> : vector<2x8xf32>
    %193 = vector.multi_reduction <add>, %192, %cst_72 [2] : vector<2x8x8xf32> to vector<2x8xf32>
    %194 = vector.shape_cast %193 : vector<2x8xf32> to vector<2x8x1xf32>
    %195 = tpu.reciprocal %194 {approx = true} : vector<2x8x1xf32> -> vector<2x8x1xf32>
    %196 = vector.broadcast %195 : vector<2x8x1xf32> to vector<2x8x8xf32>
    %197 = arith.mulf %192, %196 : vector<2x8x8xf32>
    "tpu.trace_start"() <{level = 10 : i32, message = "bqk,bkd->bqd"}> : () -> ()
    %cst_73 = arith.constant dense<0.000000e+00> : vector<2x8x16xf32>
    %198 = tpu.matmul %197, %183, %cst_73 {dimension_numbers = #tpu.dot_dimension_numbers<[2], [1], [1], [2], [0, 0, 0, 1, 1, 2], [0], [0]>} : vector<2x8x8xf32>, vector<2x8x16xf32>, vector<2x8x16xf32> -> vector<2x8x16xf32>
    "tpu.trace_stop"() : () -> ()
    %199 = vector.shape_cast %198 : vector<2x8x16xf32> to vector<16x16xf32>
    %200 = vector.extract_strided_slice %139 {offsets = [0, 0], sizes = [16, 32], strides = [1, 1]} : vector<32x32xf32> to vector<16x32xf32>
    %cst_74 = arith.constant dense<0.000000e+00> : vector<16x32xf32>
    %201 = tpu.matmul %199, %200, %cst_74 {dimension_numbers = #tpu.dot_dimension_numbers<[1], [0], [0], [1], [0, 0, 1, 1], [], []>} : vector<16x16xf32>, vector<16x32xf32>, vector<16x32xf32> -> vector<16x32xf32>
    %202 = arith.addf %180, %201 : vector<16x32xf32>
    %203 = vector.extract_strided_slice %179 {offsets = [0, 0, 16], sizes = [2, 8, 16], strides = [1, 1, 1]} : vector<2x8x96xf32> to vector<2x8x16xf32>
    %204 = vector.extract_strided_slice %179 {offsets = [0, 0, 48], sizes = [2, 8, 16], strides = [1, 1, 1]} : vector<2x8x96xf32> to vector<2x8x16xf32>
    %205 = vector.extract_strided_slice %179 {offsets = [0, 0, 80], sizes = [2, 8, 16], strides = [1, 1, 1]} : vector<2x8x96xf32> to vector<2x8x16xf32>
    "tpu.trace_start"() <{level = 10 : i32, message = "bqd,bkd->bqk"}> : () -> ()
    %cst_75 = arith.constant dense<0.000000e+00> : vector<2x8x8xf32>
    %206 = tpu.matmul %203, %204, %cst_75 {dimension_numbers = #tpu.dot_dimension_numbers<[2], [2], [1], [1], [0, 0, 0, 1, 1, 1], [0], [0]>} : vector<2x8x16xf32>, vector<2x8x16xf32>, vector<2x8x8xf32> -> vector<2x8x8xf32>
    "tpu.trace_stop"() : () -> ()
    %cst_76 = arith.constant 2.500000e-01 : f32
    %207 = vector.broadcast %cst_76 : f32 to vector<2x8x8xf32>
    %208 = arith.mulf %206, %207 : vector<2x8x8xf32>
    %209 = arith.addf %208, %1 : vector<2x8x8xf32>
    %cst_77 = arith.constant dense<0xFF800000> : vector<2x8xf32>
    %210 = vector.multi_reduction <maximumf>, %209, %cst_77 [2] : vector<2x8x8xf32> to vector<2x8xf32>
    %211 = vector.shape_cast %210 : vector<2x8xf32> to vector<2x8x1xf32>
    %212 = vector.broadcast %211 : vector<2x8x1xf32> to vector<2x8x8xf32>
    %213 = arith.subf %209, %212 : vector<2x8x8xf32>
    %214 = math.exp %213 : vector<2x8x8xf32>
    %cst_78 = arith.constant dense<0.000000e+00> : vector<2x8xf32>
    %215 = vector.multi_reduction <add>, %214, %cst_78 [2] : vector<2x8x8xf32> to vector<2x8xf32>
    %216 = vector.shape_cast %215 : vector<2x8xf32> to vector<2x8x1xf32>
    %217 = tpu.reciprocal %216 {approx = true} : vector<2x8x1xf32> -> vector<2x8x1xf32>
    %218 = vector.broadcast %217 : vector<2x8x1xf32> to vector<2x8x8xf32>
    %219 = arith.mulf %214, %218 : vector<2x8x8xf32>
    "tpu.trace_start"() <{level = 10 : i32, message = "bqk,bkd->bqd"}> : () -> ()
    %cst_79 = arith.constant dense<0.000000e+00> : vector<2x8x16xf32>
    %220 = tpu.matmul %219, %205, %cst_79 {dimension_numbers = #tpu.dot_dimension_numbers<[2], [1], [1], [2], [0, 0, 0, 1, 1, 2], [0], [0]>} : vector<2x8x8xf32>, vector<2x8x16xf32>, vector<2x8x16xf32> -> vector<2x8x16xf32>
    "tpu.trace_stop"() : () -> ()
    %221 = vector.shape_cast %220 : vector<2x8x16xf32> to vector<16x16xf32>
    %222 = vector.extract_strided_slice %139 {offsets = [16, 0], sizes = [16, 32], strides = [1, 1]} : vector<32x32xf32> to vector<16x32xf32>
    %cst_80 = arith.constant dense<0.000000e+00> : vector<16x32xf32>
    %223 = tpu.matmul %221, %222, %cst_80 {dimension_numbers = #tpu.dot_dimension_numbers<[1], [0], [0], [1], [0, 0, 1, 1], [], []>} : vector<16x16xf32>, vector<16x32xf32>, vector<16x32xf32> -> vector<16x32xf32>
    %224 = arith.addf %202, %223 : vector<16x32xf32>
    %225 = arith.addf %135, %224 : vector<16x32xf32>
    %226 = vector.broadcast %150 : vector<1x32xf32> to vector<16x32xf32>
    %227 = arith.addf %225, %226 : vector<16x32xf32>
    %cst_81 = arith.constant dense<0.000000e+00> : vector<16xf32>
    %228 = vector.multi_reduction <add>, %227, %cst_81 [1] : vector<16x32xf32> to vector<16xf32>
    %229 = vector.shape_cast %228 : vector<16xf32> to vector<16x1xf32>
    %cst_82 = arith.constant 3.200000e+01 : f32
    %230 = vector.broadcast %cst_82 : f32 to vector<16x1xf32>
    %231 = arith.divf %229, %230 : vector<16x1xf32>
    %232 = vector.broadcast %231 : vector<16x1xf32> to vector<16x32xf32>
    %233 = arith.subf %227, %232 : vector<16x32xf32>
    %234 = arith.mulf %233, %233 : vector<16x32xf32>
    %cst_83 = arith.constant dense<0.000000e+00> : vector<16xf32>
    %235 = vector.multi_reduction <add>, %234, %cst_83 [1] : vector<16x32xf32> to vector<16xf32>
    %236 = vector.shape_cast %235 : vector<16xf32> to vector<16x1xf32>
    %cst_84 = arith.constant 3.200000e+01 : f32
    %237 = vector.broadcast %cst_84 : f32 to vector<16x1xf32>
    %238 = arith.divf %236, %237 : vector<16x1xf32>
    %239 = vector.broadcast %231 : vector<16x1xf32> to vector<16x32xf32>
    %240 = arith.subf %227, %239 : vector<16x32xf32>
    %cst_85 = arith.constant 9.99999974E-6 : f32
    %241 = vector.broadcast %cst_85 : f32 to vector<16x1xf32>
    %242 = arith.addf %238, %241 : vector<16x1xf32>
    %243 = math.rsqrt %242 : vector<16x1xf32>
    %244 = vector.broadcast %243 : vector<16x1xf32> to vector<16x32xf32>
    %245 = arith.mulf %240, %244 : vector<16x32xf32>
    %246 = vector.broadcast %148 : vector<1x32xf32> to vector<16x32xf32>
    %247 = arith.mulf %245, %246 : vector<16x32xf32>
    %248 = vector.broadcast %149 : vector<1x32xf32> to vector<16x32xf32>
    %249 = arith.addf %247, %248 : vector<16x32xf32>
    %cst_86 = arith.constant dense<0.000000e+00> : vector<16x128xf32>
    %250 = tpu.matmul %249, %141, %cst_86 {dimension_numbers = #tpu.dot_dimension_numbers<[1], [0], [0], [1], [0, 0, 1, 1], [], []>} : vector<16x32xf32>, vector<32x128xf32>, vector<16x128xf32> -> vector<16x128xf32>
    %251 = vector.broadcast %153 : vector<1x128xf32> to vector<16x128xf32>
    %252 = arith.addf %250, %251 : vector<16x128xf32>
    %cst_87 = arith.constant 5.000000e-01 : f32
    %253 = vector.broadcast %cst_87 : f32 to vector<16x128xf32>
    %254 = arith.mulf %253, %252 : vector<16x128xf32>
    %255 = arith.mulf %252, %252 : vector<16x128xf32>
    %256 = arith.mulf %252, %255 : vector<16x128xf32>
    %cst_88 = arith.constant 4.471500e-02 : f32
    %257 = vector.broadcast %cst_88 : f32 to vector<16x128xf32>
    %258 = arith.mulf %257, %256 : vector<16x128xf32>
    %259 = arith.addf %252, %258 : vector<16x128xf32>
    %cst_89 = arith.constant 0.797884583 : f32
    %260 = vector.broadcast %cst_89 : f32 to vector<16x128xf32>
    %261 = arith.mulf %260, %259 : vector<16x128xf32>
    %262 = math.tanh %261 : vector<16x128xf32>
    %cst_90 = arith.constant 1.000000e+00 : f32
    %263 = vector.broadcast %cst_90 : f32 to vector<16x128xf32>
    %264 = arith.addf %263, %262 : vector<16x128xf32>
    %265 = arith.mulf %254, %264 : vector<16x128xf32>
    %cst_91 = arith.constant dense<0.000000e+00> : vector<16x32xf32>
    %266 = tpu.matmul %265, %143, %cst_91 {dimension_numbers = #tpu.dot_dimension_numbers<[1], [0], [0], [1], [0, 0, 1, 1], [], []>} : vector<16x128xf32>, vector<128x32xf32>, vector<16x32xf32> -> vector<16x32xf32>
    %267 = arith.addf %227, %266 : vector<16x32xf32>
    %268 = vector.broadcast %151 : vector<1x32xf32> to vector<16x32xf32>
    %269 = arith.addf %267, %268 : vector<16x32xf32>
    %c0_92 = arith.constant 0 : index
    %c0_93 = arith.constant 0 : index
    %270 = vector.load %arg8[%c0_92, %c0_93] : memref<2x32xf32, #tpu.memory_space<vmem>>, vector<2x32xf32>
    %271 = vector.extract_strided_slice %270 {offsets = [0, 0], sizes = [1, 32], strides = [1, 1]} : vector<2x32xf32> to vector<1x32xf32>
    %272 = vector.extract_strided_slice %270 {offsets = [1, 0], sizes = [1, 32], strides = [1, 1]} : vector<2x32xf32> to vector<1x32xf32>
    %cst_94 = arith.constant dense<0.000000e+00> : vector<16xf32>
    %273 = vector.multi_reduction <add>, %269, %cst_94 [1] : vector<16x32xf32> to vector<16xf32>
    %274 = vector.shape_cast %273 : vector<16xf32> to vector<16x1xf32>
    %cst_95 = arith.constant 3.200000e+01 : f32
    %275 = vector.broadcast %cst_95 : f32 to vector<16x1xf32>
    %276 = arith.divf %274, %275 : vector<16x1xf32>
    %277 = vector.broadcast %276 : vector<16x1xf32> to vector<16x32xf32>
    %278 = arith.subf %269, %277 : vector<16x32xf32>
    %279 = arith.mulf %278, %278 : vector<16x32xf32>
    %cst_96 = arith.constant dense<0.000000e+00> : vector<16xf32>
    %280 = vector.multi_reduction <add>, %279, %cst_96 [1] : vector<16x32xf32> to vector<16xf32>
    %281 = vector.shape_cast %280 : vector<16xf32> to vector<16x1xf32>
    %cst_97 = arith.constant 3.200000e+01 : f32
    %282 = vector.broadcast %cst_97 : f32 to vector<16x1xf32>
    %283 = arith.divf %281, %282 : vector<16x1xf32>
    %284 = vector.broadcast %276 : vector<16x1xf32> to vector<16x32xf32>
    %285 = arith.subf %269, %284 : vector<16x32xf32>
    %cst_98 = arith.constant 9.99999974E-6 : f32
    %286 = vector.broadcast %cst_98 : f32 to vector<16x1xf32>
    %287 = arith.addf %283, %286 : vector<16x1xf32>
    %288 = math.rsqrt %287 : vector<16x1xf32>
    %289 = vector.broadcast %288 : vector<16x1xf32> to vector<16x32xf32>
    %290 = arith.mulf %285, %289 : vector<16x32xf32>
    %291 = vector.broadcast %271 : vector<1x32xf32> to vector<16x32xf32>
    %292 = arith.mulf %290, %291 : vector<16x32xf32>
    %293 = vector.broadcast %272 : vector<1x32xf32> to vector<16x32xf32>
    %294 = arith.addf %292, %293 : vector<16x32xf32>
    %c0_99 = arith.constant 0 : index
    %c0_100 = arith.constant 0 : index
    %295 = vector.load %arg9[%c0_99, %c0_100] : memref<32x128xf32, #tpu.memory_space<vmem>>, vector<32x128xf32>
    %cst_101 = arith.constant dense<0.000000e+00> : vector<16x128xf32>
    %296 = tpu.matmul %294, %295, %cst_101 {dimension_numbers = #tpu.dot_dimension_numbers<[1], [0], [0], [1], [0, 0, 1, 1], [], []>} : vector<16x32xf32>, vector<32x128xf32>, vector<16x128xf32> -> vector<16x128xf32>
    %cst_102 = arith.constant dense<0xFF800000> : vector<16xf32>
    %297 = vector.multi_reduction <maximumf>, %296, %cst_102 [1] : vector<16x128xf32> to vector<16xf32>
    %298 = vector.shape_cast %297 : vector<16xf32> to vector<16x1xf32>
    %299 = vector.broadcast %298 : vector<16x1xf32> to vector<16x128xf32>
    %300 = arith.subf %296, %299 : vector<16x128xf32>
    %301 = math.exp %300 : vector<16x128xf32>
    %cst_103 = arith.constant dense<0.000000e+00> : vector<16xf32>
    %302 = vector.multi_reduction <add>, %301, %cst_103 [1] : vector<16x128xf32> to vector<16xf32>
    %303 = vector.shape_cast %302 : vector<16xf32> to vector<16x1xf32>
    %304 = math.log %303 : vector<16x1xf32>
    %305 = arith.addf %298, %304 : vector<16x1xf32>
    %c0_104 = arith.constant 0 : index
    %c0_105 = arith.constant 0 : index
    %306 = vector.load %arg2[%c0_104, %c0_105] : memref<16x1xi32, #tpu.memory_space<vmem>>, vector<16x1xi32>
    %c0_i32 = arith.constant 0 : i32
    %307 = vector.broadcast %c0_i32 : i32 to vector<16x1xi32>
    %308 = arith.cmpi sge, %306, %307 : vector<16x1xi32>
    %309 = arith.extui %308 : vector<16x1xi1> to vector<16x1xi32>
    %310 = arith.sitofp %309 : vector<16x1xi32> to vector<16x1xf32>
    %311 = tpu.iota {dimensions = array<i32: 1>} : vector<16x128xi32>
    %312 = vector.broadcast %306 : vector<16x1xi32> to vector<16x128xi32>
    %313 = arith.cmpi eq, %311, %312 : vector<16x128xi32>
    %314 = arith.extui %313 : vector<16x128xi1> to vector<16x128xi32>
    %315 = arith.sitofp %314 : vector<16x128xi32> to vector<16x128xf32>
    %316 = arith.mulf %296, %315 : vector<16x128xf32>
    %cst_106 = arith.constant dense<0.000000e+00> : vector<16xf32>
    %317 = vector.multi_reduction <add>, %316, %cst_106 [1] : vector<16x128xf32> to vector<16xf32>
    %318 = vector.shape_cast %317 : vector<16xf32> to vector<16x1xf32>
    %319 = arith.subf %305, %318 : vector<16x1xf32>
    %320 = arith.mulf %319, %310 : vector<16x1xf32>
    %321 = vector.shape_cast %320 : vector<16x1xf32> to vector<1x16x1xf32>
    %cst_107 = arith.constant dense<0.000000e+00> : vector<1xf32>
    %322 = vector.multi_reduction <add>, %321, %cst_107 [1, 2] : vector<1x16x1xf32> to vector<1xf32>
    %323 = vector.shape_cast %322 : vector<1xf32> to vector<1x1x1xf32>
    %324 = vector.extract %323[0, 0, 0] : f32 from vector<1x1x1xf32>
    %325 = vector.broadcast %324 : f32 to vector<1x1xf32>
    %cst_108 = arith.constant 0.0714285746 : f32
    %326 = vector.broadcast %cst_108 : f32 to vector<1x1xf32>
    %327 = arith.mulf %325, %326 : vector<1x1xf32>
    %328 = math.exp %327 : vector<1x1xf32>
    %c0_109 = arith.constant 0 : index
    %c0_110 = arith.constant 0 : index
    %329 = vector.load %arg10[%c0_109, %c0_110] : memref<1x1xf32, #tpu.memory_space<vmem>>, vector<1x1xf32>
    tpu.vector_store %arg10[%c0_109, %c0_110], %328 {strides = array<i32>} : memref<1x1xf32, #tpu.memory_space<vmem>>, vector<1x1xf32>,
    return
  }
}

</mosaic_0001>

<llo_original>
// kernel: tpu_custom_call.1
$region0: #{tpu_custom_call.1}
  #allocation0 [shape = 'u32[]', space=smem, size = 0x4, offset = 0x4, fixed_abs, tag = 'smem constant byte address 0x4 - core index']
  #allocation1 [shape = 'u32[72,128]{1,0:T(1,128)}', space=vmem, size = 0x9000, scoped, tag = 'internal scratch']
  %s0 = inlined_call_operand.vmem [shape: f32[16,32], index: 0, kind: input, shape index: {}]
  %s1 = inlined_call_operand.vmem [shape: f32[2,8,8], index: 1, kind: input, shape index: {}]
  %s2 = inlined_call_operand.vmem [shape: s32[16,1], index: 2, kind: input, shape index: {}]
  %s3 = inlined_call_operand.vmem [shape: f32[2,32,96], index: 3, kind: input, shape index: {}]
  %s4 = inlined_call_operand.vmem [shape: f32[2,32,32], index: 4, kind: input, shape index: {}]
  %s5 = inlined_call_operand.vmem [shape: f32[2,32,128], index: 5, kind: input, shape index: {}]
  %s6 = inlined_call_operand.vmem [shape: f32[2,128,32], index: 6, kind: input, shape index: {}]
  %s7 = inlined_call_operand.vmem [shape: f32[2,8,128], index: 7, kind: input, shape index: {}]
  %s8 = inlined_call_operand.vmem [shape: f32[2,32], index: 8, kind: input, shape index: {}]
  %s9 = inlined_call_operand.vmem [shape: f32[32,128], index: 9, kind: input, shape index: {}]
  %s10 = inlined_call_operand.hbm [shape: f32[1,1], index: 10, kind: output, shape index: {}]
  %s11 = sld [smem:[#allocation0]]
  $region50: #{tpu_custom_call.1} parent=0
    _
  %s13 = ssub.s32 1, %s11
  %s14 = scalar_select 0, %s13, %s11
  $region1: #{tpu_custom_call.1} parent=0
    #allocation2 [shape = 'u8[512]{0}', space=vmem, size = 0x400, scoped, tag = 'output window, operand 0, single buffered']
    #allocation3 [shape = 's32[1]{0}', space=sflag, size = 0x4, scoped, tag = 'scoped memory for tpu_custom_call.1']
    %15 = vsyncpa [#allocation3], 0
    // Predicated region
    $region2: #{tpu_custom_call.1} parent=1 // pred_check
      _
    $region3: #{tpu_custom_call.1} parent=1 // pred_check_branch
      %17 = sbr.rel (0) target = $region5
    $region4: #{tpu_custom_call.1} parent=1 // pred_region
      _
    $region5: #{tpu_custom_call.1} parent=1 // pred_fallthru
      _
    // Predicated region
    $region6: #{tpu_custom_call.1} parent=1 // pred_check
      _
    $region7: #{tpu_custom_call.1} parent=1 // pred_check_branch
      %19 = sbr.rel (0) target = $region9
    $region8: #{tpu_custom_call.1} parent=1 // pred_region
      _
    $region9: #{tpu_custom_call.1} parent=1 // pred_fallthru
      _
    // Predicated region
    $region10: #{tpu_custom_call.1} parent=1 // pred_check
      _
    $region11: #{tpu_custom_call.1} parent=1 // pred_check_branch
      %21 = sbr.rel (0) target = $region13
    $region12: #{tpu_custom_call.1} parent=1 // pred_region
      _
    $region13: #{tpu_custom_call.1} parent=1 // pred_fallthru
      _
    // Predicated region
    $region14: #{tpu_custom_call.1} parent=1 // pred_check
      _
    $region15: #{tpu_custom_call.1} parent=1 // pred_check_branch
      %23 = sbr.rel (0) target = $region17
    $region16: #{tpu_custom_call.1} parent=1 // pred_region
      _
    $region17: #{tpu_custom_call.1} parent=1 // pred_fallthru
      _
    // Predicated region
    $region18: #{tpu_custom_call.1} parent=1 // pred_check
      _
    $region19: #{tpu_custom_call.1} parent=1 // pred_check_branch
      %25 = sbr.rel (0) target = $region21
    $region20: #{tpu_custom_call.1} parent=1 // pred_region
      _
    $region21: #{tpu_custom_call.1} parent=1 // pred_fallthru
      _
    // Predicated region
    $region22: #{tpu_custom_call.1} parent=1 // pred_check
      _
    $region23: #{tpu_custom_call.1} parent=1 // pred_check_branch
      %27 = sbr.rel (0) target = $region25
    $region24: #{tpu_custom_call.1} parent=1 // pred_region
      _
    $region25: #{tpu_custom_call.1} parent=1 // pred_fallthru
      _
    // Predicated region
    $region26: #{tpu_custom_call.1} parent=1 // pred_check
      _
    $region27: #{tpu_custom_call.1} parent=1 // pred_check_branch
      %29 = sbr.rel (0) target = $region29
    $region28: #{tpu_custom_call.1} parent=1 // pred_region
      _
    $region29: #{tpu_custom_call.1} parent=1 // pred_fallthru
      _
    // Predicated region
    $region30: #{tpu_custom_call.1} parent=1 // pred_check
      _
    $region31: #{tpu_custom_call.1} parent=1 // pred_check_branch
      %31 = sbr.rel (0) target = $region33
    $region32: #{tpu_custom_call.1} parent=1 // pred_region
      _
    $region33: #{tpu_custom_call.1} parent=1 // pred_fallthru
      _
    // Predicated region
    $region34: #{tpu_custom_call.1} parent=1 // pred_check
      _
    $region35: #{tpu_custom_call.1} parent=1 // pred_check_branch
      %33 = sbr.rel (0) target = $region37
    $region36: #{tpu_custom_call.1} parent=1 // pred_region
      _
    $region37: #{tpu_custom_call.1} parent=1 // pred_fallthru
      _
    // Predicated region
    $region38: #{tpu_custom_call.1} parent=1 // pred_check
      _
    $region39: #{tpu_custom_call.1} parent=1 // pred_check_branch
      %35 = sbr.rel (0) target = $region41
    $region40: #{tpu_custom_call.1} parent=1 // pred_region
      _
    $region41: #{tpu_custom_call.1} parent=1 // pred_fallthru
      _
    %v36 = vld [vmem:[%s0] sm:$0xff]
    %v37 = vld [vmem:[%s0 + $0x8] sm:$0xff]
    %v38 = vld [vmem:[%s1] sm:$0xff]
    %v39 = vld [vmem:[%s1 + $0x8] sm:$0xff]
    %v40 = vld [vmem:[%s3] sm:$0xff]
    %v41 = vld [vmem:[%s3 + $0x8] sm:$0xff]
    %v42 = vld [vmem:[%s3 + $0x10] sm:$0xff]
    %v43 = vld [vmem:[%s3 + $0x18] sm:$0xff]
    %v44 = vld [vmem:[%s4] sm:$0xff]
    %v45 = vld [vmem:[%s4 + $0x8] sm:$0xff]
    %v46 = vld [vmem:[%s4 + $0x10] sm:$0xff]
    %v47 = vld [vmem:[%s4 + $0x18] sm:$0xff]
    %v48 = vld [vmem:[%s5] sm:$0xff]
    %v49 = vld [vmem:[%s5 + $0x8] sm:$0xff]
    %v50 = vld [vmem:[%s5 + $0x10] sm:$0xff]
    %v51 = vld [vmem:[%s5 + $0x18] sm:$0xff]
    %v52 = vld [vmem:[%s6] sm:$0xff]
    %v53 = vld [vmem:[%s6 + $0x8] sm:$0xff]
    %v54 = vld [vmem:[%s6 + $0x10] sm:$0xff]
    %v55 = vld [vmem:[%s6 + $0x18] sm:$0xff]
    %v56 = vld [vmem:[%s6 + $0x20] sm:$0xff]
    %v57 = vld [vmem:[%s6 + $0x28] sm:$0xff]
    %v58 = vld [vmem:[%s6 + $0x30] sm:$0xff]
    %v59 = vld [vmem:[%s6 + $0x38] sm:$0xff]
    %v60 = vld [vmem:[%s6 + $0x40] sm:$0xff]
    %v61 = vld [vmem:[%s6 + $0x48] sm:$0xff]
    %v62 = vld [vmem:[%s6 + $0x50] sm:$0xff]
    %v63 = vld [vmem:[%s6 + $0x58] sm:$0xff]
    %v64 = vld [vmem:[%s6 + $0x60] sm:$0xff]
    %v65 = vld [vmem:[%s6 + $0x68] sm:$0xff]
    %v66 = vld [vmem:[%s6 + $0x70] sm:$0xff]
    %v67 = vld [vmem:[%s6 + $0x78] sm:$0xff]
    %v68 = vld [vmem:[%s7] sm:$0xff]
    %vm69 = vcmask 261120
    %v70 = vsel %vm69, %v36, 0.0
    %71 = vadd.xlane.f32.xlu0 %v70
    %v72 = vpop.xlane.xlu0 %71
    %v73 = vsel %vm69, %v37, 0.0
    %74 = vadd.xlane.f32.xlu0 %v73
    %v75 = vpop.xlane.xlu0 %74
    %v76 = vrcp.pop 32.0
    %v77 = vmul.f32 32.0, %v76
    %v78 = vsub.f32 1.0, %v77
    %v79 = vmul.f32 %v76, %v78
    %v80 = vadd.f32 %v76, %v79
    %vm81 = vweird.f32 %v76
    %v82 = vsel %vm81, %v76, %v80
    %v83 = vmul.f32 %v72, %v82
    %v84 = vmul.f32 %v75, %v82
    %v85 = vsub.f32 %v36, %v83
    %v86 = vsub.f32 %v37, %v84
    %v87 = vmul.f32 %v85, %v85
    %v88 = vmul.f32 %v86, %v86
    %v89 = vsel %vm69, %v87, 0.0
    %90 = vadd.xlane.f32.xlu0 %v89
    %v91 = vpop.xlane.xlu0 %90
    %v92 = vsel %vm69, %v88, 0.0
    %93 = vadd.xlane.f32.xlu0 %v92
    %v94 = vpop.xlane.xlu0 %93
    %v95 = vmul.f32 %v91, %v82
    %v96 = vmul.f32 %v94, %v82
    %v97 = vadd.f32 %v95, 1e-05
    %v98 = vadd.f32 %v96, 1e-05
    %v99 = vrsqrt.pop %v97
    %v100 = vmul.f32 %v99, %v97
    %v101 = vmul.f32 %v100, %v99
    %v102 = vmul.f32 0.5, %v101
    %v103 = vsub.f32 1.5, %v102
    %v104 = vmul.f32 %v99, %v103
    %vm105 = vweird.f32 %v97
    %vm106 = vweird.f32 %v99
    %vm107 = vmor %vm105, %vm106
    %v108 = vsel %vm107, %v99, %v104
    %v109 = vrsqrt.pop %v98
    %v110 = vmul.f32 %v109, %v98
    %v111 = vmul.f32 %v110, %v109
    %v112 = vmul.f32 0.5, %v111
    %v113 = vsub.f32 1.5, %v112
    %v114 = vmul.f32 %v109, %v113
    %vm115 = vweird.f32 %v98
    %vm116 = vweird.f32 %v109
    %vm117 = vmor %vm115, %vm116
    %v118 = vsel %vm117, %v109, %v114
    %v119 = vmul.f32 %v85, %v108
    %v120 = vmul.f32 %v86, %v118
    %v121 = vperm.slane %v68, 0
    %v122 = vmul.f32 %v119, %v121
    %v123 = vmul.f32 %v120, %v121
    %v124 = vperm.slane %v68, 1
    %v125 = vadd.f32 %v122, %v124
    %v126 = vadd.f32 %v123, %v124
    %v127 = vperm.slane %v68, 6
    %v129 = vsel %vm69, %v125, 0
    %v132 = vsel %vm69, %v126, 0
    %134 = vmatpush.msra.mxu0 0.0
    %135 = vmatpush.msra.mxu0 0.0
    %136 = vmatpush.msra.mxu0 0.0
    %137 = vmatpush.msra.mxu0 0.0
    %138 = vmatpush.msra.mxu0 0.0
    %139 = vmatpush.msra.mxu0 0.0
    %140 = vmatpush.msra.mxu0 0.0
    %141 = vmatpush.msra.mxu0 0.0
    %142 = vmatpush.msra.mxu0 0.0
    %143 = vmatpush.msra.mxu0 0.0
    %144 = vmatpush.msra.mxu0 0.0
    %145 = vmatpush.msra.mxu0 0.0
    %146 = vmatpush.msra.mxu0 %v43
    %147 = vmatpush.msra.mxu0 %v42
    %148 = vmatpush.msra.mxu0 %v41
    %149 = vmatpush.msra.mxu0 %v40
    %150 = vmatmul.f32.gmra.mxu0 %v129
    %v151 = vpop.f32.mrf.mxu0
    %v152 = vadd.f32 %v127, %v151
    %153 = vmatmul.f32.gmra.mxu0 %v132
    %v154 = vpop.f32.mrf.mxu0
    %v155 = vadd.f32 %v127, %v154
    %156 = vdwg.mxu0
    %158 = vrot.lane.b32.xlu0 %v152, 96
    %v159 = vpop.permute.xlu0 %158
    %vm160 = vcmask 130048
    %v161 = vsel %vm160, %v152, 0
    %v163 = vsel %vm160, %v159, 0
    %165 = vmatpush.xpose.msra.mxu0 0.0
    %166 = vmatpush.xpose.msra.mxu0 0.0
    %167 = vmatpush.xpose.msra.mxu0 0.0
    %168 = vmatpush.xpose.msra.mxu0 0.0
    %169 = vmatpush.xpose.msra.mxu0 0.0
    %170 = vmatpush.xpose.msra.mxu0 0.0
    %171 = vmatpush.xpose.msra.mxu0 0.0
    %172 = vmatpush.xpose.msra.mxu0 0.0
    %173 = vmatpush.xpose.msra.mxu0 0.0
    %174 = vmatpush.xpose.msra.mxu0 0.0
    %175 = vmatpush.xpose.msra.mxu0 0.0
    %176 = vmatpush.xpose.msra.mxu0 0.0
    %177 = vmatpush.xpose.msra.mxu0 0.0
    %178 = vmatpush.xpose.msra.mxu0 0.0
    %179 = vmatpush.xpose.msra.mxu0 0.0
    %180 = vmatpush.xpose.msra.mxu0 %v163
    %181 = vmatmul.f32.gmra.mxu0 %v161
    %v182 = vpop.f32.mrf.mxu0
    %v183 = vadd.f32 0.0, %v182
    %184 = vdwg.mxu0
    %186 = vrot.lane.b32.xlu0 %v155, 96
    %v187 = vpop.permute.xlu0 %186
    %v188 = vsel %vm160, %v155, 0
    %v190 = vsel %vm160, %v187, 0
    %192 = vmatpush.xpose.msra.mxu0 0.0
    %193 = vmatpush.xpose.msra.mxu0 0.0
    %194 = vmatpush.xpose.msra.mxu0 0.0
    %195 = vmatpush.xpose.msra.mxu0 0.0
    %196 = vmatpush.xpose.msra.mxu0 0.0
    %197 = vmatpush.xpose.msra.mxu0 0.0
    %198 = vmatpush.xpose.msra.mxu0 0.0
    %199 = vmatpush.xpose.msra.mxu0 0.0
    %200 = vmatpush.xpose.msra.mxu0 0.0
    %201 = vmatpush.xpose.msra.mxu0 0.0
    %202 = vmatpush.xpose.msra.mxu0 0.0
    %203 = vmatpush.xpose.msra.mxu0 0.0
    %204 = vmatpush.xpose.msra.mxu0 0.0
    %205 = vmatpush.xpose.msra.mxu0 0.0
    %206 = vmatpush.xpose.msra.mxu0 0.0
    %207 = vmatpush.xpose.msra.mxu0 %v190
    %208 = vmatmul.f32.gmra.mxu0 %v188
    %v209 = vpop.f32.mrf.mxu0
    %v210 = vadd.f32 0.0, %v209
    %211 = vdwg.mxu0
    %v212 = vmul.f32 %v183, 0.25
    %v213 = vmul.f32 %v210, 0.25
    %v214 = vadd.f32 %v212, %v38
    %v215 = vadd.f32 %v213, %v39
    %vm216 = vcmask 64512
    %v217 = vsel %vm216, %v214, -inf
    %218 = vmax.xlane.f32.xlu0 %v217
    %v219 = vpop.xlane.xlu0 %218
    %v220 = vsel %vm216, %v215, -inf
    %221 = vmax.xlane.f32.xlu0 %v220
    %v222 = vpop.xlane.xlu0 %221
    %v223 = vsub.f32 %v214, %v219
    %v224 = vsub.f32 %v215, %v222
    %v225 = vmul.f32 %v223, 1.442695
    %v226 = vpow.pop %v225
    %v227 = vmul.f32 %v224, 1.442695
    %v228 = vpow.pop %v227
    %v229 = vsel %vm216, %v226, 0.0
    %230 = vadd.xlane.f32.xlu0 %v229
    %v231 = vpop.xlane.xlu0 %230
    %v232 = vsel %vm216, %v228, 0.0
    %233 = vadd.xlane.f32.xlu0 %v232
    %v234 = vpop.xlane.xlu0 %233
    %v235 = vrcp.pop %v231
    %v236 = vrcp.pop %v234
    %v237 = vmul.f32 %v226, %v235
    %v238 = vmul.f32 %v228, %v236
    %239 = vrot.lane.b32.xlu0 %v152, 64
    %v240 = vpop.permute.xlu0 %239
    %v243 = vsel %vm216, %v237, 0
    %245 = vmatpush.msra.mxu0 0.0
    %246 = vmatpush.msra.mxu0 0.0
    %247 = vmatpush.msra.mxu0 0.0
    %248 = vmatpush.msra.mxu0 0.0
    %249 = vmatpush.msra.mxu0 0.0
    %250 = vmatpush.msra.mxu0 0.0
    %251 = vmatpush.msra.mxu0 0.0
    %252 = vmatpush.msra.mxu0 0.0
    %253 = vmatpush.msra.mxu0 0.0
    %254 = vmatpush.msra.mxu0 0.0
    %255 = vmatpush.msra.mxu0 0.0
    %256 = vmatpush.msra.mxu0 0.0
    %257 = vmatpush.msra.mxu0 0.0
    %258 = vmatpush.msra.mxu0 0.0
    %259 = vmatpush.msra.mxu0 0.0
    %260 = vmatpush.msra.mxu0 %v240
    %261 = vmatmul.f32.gmra.mxu0 %v243
    %v262 = vpop.f32.mrf.mxu0
    %v263 = vadd.f32 0.0, %v262
    %264 = vdwg.mxu0
    %265 = vrot.lane.b32.xlu0 %v155, 64
    %v266 = vpop.permute.xlu0 %265
    %v269 = vsel %vm216, %v238, 0
    %271 = vmatpush.msra.mxu0 0.0
    %272 = vmatpush.msra.mxu0 0.0
    %273 = vmatpush.msra.mxu0 0.0
    %274 = vmatpush.msra.mxu0 0.0
    %275 = vmatpush.msra.mxu0 0.0
    %276 = vmatpush.msra.mxu0 0.0
    %277 = vmatpush.msra.mxu0 0.0
    %278 = vmatpush.msra.mxu0 0.0
    %279 = vmatpush.msra.mxu0 0.0
    %280 = vmatpush.msra.mxu0 0.0
    %281 = vmatpush.msra.mxu0 0.0
    %282 = vmatpush.msra.mxu0 0.0
    %283 = vmatpush.msra.mxu0 0.0
    %284 = vmatpush.msra.mxu0 0.0
    %285 = vmatpush.msra.mxu0 0.0
    %286 = vmatpush.msra.mxu0 %v266
    %287 = vmatmul.f32.gmra.mxu0 %v269
    %v288 = vpop.f32.mrf.mxu0
    %v289 = vadd.f32 0.0, %v288
    %290 = vdwg.mxu0
    %291 = vrot.lane.b32.xlu0 %v152, 112
    %v292 = vpop.permute.xlu0 %291
    %293 = vrot.lane.b32.xlu0 %v152, 80
    %v294 = vpop.permute.xlu0 %293
    %v295 = vsel %vm160, %v292, 0
    %v297 = vsel %vm160, %v294, 0
    %299 = vmatpush.xpose.msra.mxu0 0.0
    %300 = vmatpush.xpose.msra.mxu0 0.0
    %301 = vmatpush.xpose.msra.mxu0 0.0
    %302 = vmatpush.xpose.msra.mxu0 0.0
    %303 = vmatpush.xpose.msra.mxu0 0.0
    %304 = vmatpush.xpose.msra.mxu0 0.0
    %305 = vmatpush.xpose.msra.mxu0 0.0
    %306 = vmatpush.xpose.msra.mxu0 0.0
    %307 = vmatpush.xpose.msra.mxu0 0.0
    %308 = vmatpush.xpose.msra.mxu0 0.0
    %309 = vmatpush.xpose.msra.mxu0 0.0
    %310 = vmatpush.xpose.msra.mxu0 0.0
    %311 = vmatpush.xpose.msra.mxu0 0.0
    %312 = vmatpush.xpose.msra.mxu0 0.0
    %313 = vmatpush.xpose.msra.mxu0 0.0
    %314 = vmatpush.xpose.msra.mxu0 %v297
    %315 = vmatmul.f32.gmra.mxu0 %v295
    %v316 = vpop.f32.mrf.mxu0
    %v317 = vadd.f32 0.0, %v316
    %318 = vdwg.mxu0
    %319 = vrot.lane.b32.xlu0 %v155, 112
    %v320 = vpop.permute.xlu0 %319
    %321 = vrot.lane.b32.xlu0 %v155, 80
    %v322 = vpop.permute.xlu0 %321
    %v323 = vsel %vm160, %v320, 0
    %v325 = vsel %vm160, %v322, 0
    %327 = vmatpush.xpose.msra.mxu0 0.0
    %328 = vmatpush.xpose.msra.mxu0 0.0
    %329 = vmatpush.xpose.msra.mxu0 0.0
    %330 = vmatpush.xpose.msra.mxu0 0.0
    %331 = vmatpush.xpose.msra.mxu0 0.0
    %332 = vmatpush.xpose.msra.mxu0 0.0
    %333 = vmatpush.xpose.msra.mxu0 0.0
    %334 = vmatpush.xpose.msra.mxu0 0.0
    %335 = vmatpush.xpose.msra.mxu0 0.0
    %336 = vmatpush.xpose.msra.mxu0 0.0
    %337 = vmatpush.xpose.msra.mxu0 0.0
    %338 = vmatpush.xpose.msra.mxu0 0.0
    %339 = vmatpush.xpose.msra.mxu0 0.0
    %340 = vmatpush.xpose.msra.mxu0 0.0
    %341 = vmatpush.xpose.msra.mxu0 0.0
    %342 = vmatpush.xpose.msra.mxu0 %v325
    %343 = vmatmul.f32.gmra.mxu0 %v323
    %v344 = vpop.f32.mrf.mxu0
    %v345 = vadd.f32 0.0, %v344
    %346 = vdwg.mxu0
    %v347 = vmul.f32 %v317, 0.25
    %v348 = vmul.f32 %v345, 0.25
    %v349 = vadd.f32 %v347, %v38
    %v350 = vadd.f32 %v348, %v39
    %v351 = vsel %vm216, %v349, -inf
    %352 = vmax.xlane.f32.xlu0 %v351
    %v353 = vpop.xlane.xlu0 %352
    %v354 = vsel %vm216, %v350, -inf
    %355 = vmax.xlane.f32.xlu0 %v354
    %v356 = vpop.xlane.xlu0 %355
    %v357 = vsub.f32 %v349, %v353
    %v358 = vsub.f32 %v350, %v356
    %v359 = vmul.f32 %v357, 1.442695
    %v360 = vpow.pop %v359
    %v361 = vmul.f32 %v358, 1.442695
    %v362 = vpow.pop %v361
    %v363 = vsel %vm216, %v360, 0.0
    %364 = vadd.xlane.f32.xlu0 %v363
    %v365 = vpop.xlane.xlu0 %364
    %v366 = vsel %vm216, %v362, 0.0
    %367 = vadd.xlane.f32.xlu0 %v366
    %v368 = vpop.xlane.xlu0 %367
    %v369 = vrcp.pop %v365
    %v370 = vrcp.pop %v368
    %v371 = vmul.f32 %v360, %v369
    %v372 = vmul.f32 %v362, %v370
    %373 = vrot.lane.b32.xlu0 %v152, 48
    %v374 = vpop.permute.xlu0 %373
    %v377 = vsel %vm216, %v371, 0
    %379 = vmatpush.msra.mxu0 0.0
    %380 = vmatpush.msra.mxu0 0.0
    %381 = vmatpush.msra.mxu0 0.0
    %382 = vmatpush.msra.mxu0 0.0
    %383 = vmatpush.msra.mxu0 0.0
    %384 = vmatpush.msra.mxu0 0.0
    %385 = vmatpush.msra.mxu0 0.0
    %386 = vmatpush.msra.mxu0 0.0
    %387 = vmatpush.msra.mxu0 0.0
    %388 = vmatpush.msra.mxu0 0.0
    %389 = vmatpush.msra.mxu0 0.0
    %390 = vmatpush.msra.mxu0 0.0
    %391 = vmatpush.msra.mxu0 0.0
    %392 = vmatpush.msra.mxu0 0.0
    %393 = vmatpush.msra.mxu0 0.0
    %394 = vmatpush.msra.mxu0 %v374
    %395 = vmatmul.f32.gmra.mxu0 %v377
    %v396 = vpop.f32.mrf.mxu0
    %v397 = vadd.f32 0.0, %v396
    %398 = vdwg.mxu0
    %399 = vrot.lane.b32.xlu0 %v155, 48
    %v400 = vpop.permute.xlu0 %399
    %v403 = vsel %vm216, %v372, 0
    %405 = vmatpush.msra.mxu0 0.0
    %406 = vmatpush.msra.mxu0 0.0
    %407 = vmatpush.msra.mxu0 0.0
    %408 = vmatpush.msra.mxu0 0.0
    %409 = vmatpush.msra.mxu0 0.0
    %410 = vmatpush.msra.mxu0 0.0
    %411 = vmatpush.msra.mxu0 0.0
    %412 = vmatpush.msra.mxu0 0.0
    %413 = vmatpush.msra.mxu0 0.0
    %414 = vmatpush.msra.mxu0 0.0
    %415 = vmatpush.msra.mxu0 0.0
    %416 = vmatpush.msra.mxu0 0.0
    %417 = vmatpush.msra.mxu0 0.0
    %418 = vmatpush.msra.mxu0 0.0
    %419 = vmatpush.msra.mxu0 0.0
    %420 = vmatpush.msra.mxu0 %v400
    %421 = vmatmul.f32.gmra.mxu0 %v403
    %v422 = vpop.f32.mrf.mxu0
    %v423 = vadd.f32 0.0, %v422
    %424 = vdwg.mxu0
    %v426 = vsel %vm160, %v397, 0
    %v429 = vsel %vm160, %v423, 0
    %431 = vmatpush.msra.mxu0 0.0
    %432 = vmatpush.msra.mxu0 0.0
    %433 = vmatpush.msra.mxu0 0.0
    %434 = vmatpush.msra.mxu0 0.0
    %435 = vmatpush.msra.mxu0 0.0
    %436 = vmatpush.msra.mxu0 0.0
    %437 = vmatpush.msra.mxu0 0.0
    %438 = vmatpush.msra.mxu0 0.0
    %439 = vmatpush.msra.mxu0 0.0
    %440 = vmatpush.msra.mxu0 0.0
    %441 = vmatpush.msra.mxu0 0.0
    %442 = vmatpush.msra.mxu0 0.0
    %443 = vmatpush.msra.mxu0 0.0
    %444 = vmatpush.msra.mxu0 0.0
    %445 = vmatpush.msra.mxu0 %v47
    %446 = vmatpush.msra.mxu0 %v46
    %447 = vmatmul.f32.gmra.mxu0 %v426
    %v448 = vpop.f32.mrf.mxu0
    %v449 = vadd.f32 0.0, %v448
    %450 = vmatmul.f32.gmra.mxu0 %v429
    %v451 = vpop.f32.mrf.mxu0
    %v452 = vadd.f32 0.0, %v451
    %453 = vdwg.mxu0
    %v455 = vsel %vm160, %v263, 0
    %v458 = vsel %vm160, %v289, 0
    %460 = vmatpush.msra.mxu0 0.0
    %461 = vmatpush.msra.mxu0 0.0
    %462 = vmatpush.msra.mxu0 0.0
    %463 = vmatpush.msra.mxu0 0.0
    %464 = vmatpush.msra.mxu0 0.0
    %465 = vmatpush.msra.mxu0 0.0
    %466 = vmatpush.msra.mxu0 0.0
    %467 = vmatpush.msra.mxu0 0.0
    %468 = vmatpush.msra.mxu0 0.0
    %469 = vmatpush.msra.mxu0 0.0
    %470 = vmatpush.msra.mxu0 0.0
    %471 = vmatpush.msra.mxu0 0.0
    %472 = vmatpush.msra.mxu0 0.0
    %473 = vmatpush.msra.mxu0 0.0
    %474 = vmatpush.msra.mxu0 %v45
    %475 = vmatpush.msra.mxu0 %v44
    %476 = vmatmul.f32.gmra.mxu0 %v455
    %v477 = vpop.f32.mrf.mxu0
    %v478 = vadd.f32 %v449, %v477
    %479 = vmatmul.f32.gmra.mxu0 %v458
    %v480 = vpop.f32.mrf.mxu0
    %v481 = vadd.f32 %v452, %v480
    %482 = vdwg.mxu0
    %v483 = vadd.f32 %v36, %v478
    %v484 = vadd.f32 %v37, %v481
    %v485 = vperm.slane %v68, 4
    %v486 = vadd.f32 %v483, %v485
    %v487 = vadd.f32 %v484, %v485
    %v488 = vsel %vm69, %v486, 0.0
    %489 = vadd.xlane.f32.xlu0 %v488
    %v490 = vpop.xlane.xlu0 %489
    %v491 = vsel %vm69, %v487, 0.0
    %492 = vadd.xlane.f32.xlu0 %v491
    %v493 = vpop.xlane.xlu0 %492
    %v494 = vmul.f32 %v490, %v82
    %v495 = vmul.f32 %v493, %v82
    %v496 = vsub.f32 %v486, %v494
    %v497 = vsub.f32 %v487, %v495
    %v498 = vmul.f32 %v496, %v496
    %v499 = vmul.f32 %v497, %v497
    %v500 = vsel %vm69, %v498, 0.0
    %501 = vadd.xlane.f32.xlu0 %v500
    %v502 = vpop.xlane.xlu0 %501
    %v503 = vsel %vm69, %v499, 0.0
    %504 = vadd.xlane.f32.xlu0 %v503
    %v505 = vpop.xlane.xlu0 %504
    %v506 = vmul.f32 %v502, %v82
    %v507 = vmul.f32 %v505, %v82
    %v508 = vadd.f32 %v506, 1e-05
    %v509 = vadd.f32 %v507, 1e-05
    %v510 = vrsqrt.pop %v508
    %v511 = vmul.f32 %v510, %v508
    %v512 = vmul.f32 %v511, %v510
    %v513 = vmul.f32 0.5, %v512
    %v514 = vsub.f32 1.5, %v513
    %v515 = vmul.f32 %v510, %v514
    %vm516 = vweird.f32 %v508
    %vm517 = vweird.f32 %v510
    %vm518 = vmor %vm516, %vm517
    %v519 = vsel %vm518, %v510, %v515
    %v520 = vrsqrt.pop %v509
    %v521 = vmul.f32 %v520, %v509
    %v522 = vmul.f32 %v521, %v520
    %v523 = vmul.f32 0.5, %v522
    %v524 = vsub.f32 1.5, %v523
    %v525 = vmul.f32 %v520, %v524
    %vm526 = vweird.f32 %v509
    %vm527 = vweird.f32 %v520
    %vm528 = vmor %vm526, %vm527
    %v529 = vsel %vm528, %v520, %v525
    %v530 = vmul.f32 %v496, %v519
    %v531 = vmul.f32 %v497, %v529
    %v532 = vperm.slane %v68, 2
    %v533 = vmul.f32 %v530, %v532
    %v534 = vmul.f32 %v531, %v532
    %v535 = vperm.slane %v68, 3
    %v536 = vadd.f32 %v533, %v535
    %v537 = vadd.f32 %v534, %v535
    %v538 = vperm.slane %v68, 7
    %v540 = vsel %vm69, %v536, 0
    %v543 = vsel %vm69, %v537, 0
    %545 = vmatpush.msra.mxu0 0.0
    %546 = vmatpush.msra.mxu0 0.0
    %547 = vmatpush.msra.mxu0 0.0
    %548 = vmatpush.msra.mxu0 0.0
    %549 = vmatpush.msra.mxu0 0.0
    %550 = vmatpush.msra.mxu0 0.0
    %551 = vmatpush.msra.mxu0 0.0
    %552 = vmatpush.msra.mxu0 0.0
    %553 = vmatpush.msra.mxu0 0.0
    %554 = vmatpush.msra.mxu0 0.0
    %555 = vmatpush.msra.mxu0 0.0
    %556 = vmatpush.msra.mxu0 0.0
    %557 = vmatpush.msra.mxu0 %v51
    %558 = vmatpush.msra.mxu0 %v50
    %559 = vmatpush.msra.mxu0 %v49
    %560 = vmatpush.msra.mxu0 %v48
    %561 = vmatmul.f32.gmra.mxu0 %v540
    %v562 = vpop.f32.mrf.mxu0
    %v563 = vadd.f32 %v538, %v562
    %564 = vmatmul.f32.gmra.mxu0 %v543
    %v565 = vpop.f32.mrf.mxu0
    %v566 = vadd.f32 %v538, %v565
    %567 = vdwg.mxu0
    %v568 = vmul.f32 %v563, 0.5
    %v569 = vmul.f32 %v566, 0.5
    %v570 = vmul.f32 %v563, %v563
    %v571 = vmul.f32 %v566, %v566
    %v572 = vmul.f32 %v563, %v570
    %v573 = vmul.f32 %v566, %v571
    %v574 = vmul.f32 %v572, 0.044715
    %v575 = vmul.f32 %v573, 0.044715
    %v576 = vadd.f32 %v563, %v574
    %v577 = vadd.f32 %v566, %v575
    %v578 = vmul.f32 %v576, 0.7978846
    %v579 = vmul.f32 %v577, 0.7978846
    %v580 = vtanh.pop %v578
    %v581 = vtanh.pop %v579
    %v582 = vadd.f32 %v580, 1.0
    %v583 = vadd.f32 %v581, 1.0
    %v584 = vmul.f32 %v568, %v582
    %v585 = vmul.f32 %v569, %v583
    %586 = vmatpush.msra.mxu0 %v67
    %587 = vmatpush.msra.mxu0 %v66
    %588 = vmatpush.msra.mxu0 %v65
    %589 = vmatpush.msra.mxu0 %v64
    %590 = vmatpush.msra.mxu0 %v63
    %591 = vmatpush.msra.mxu0 %v62
    %592 = vmatpush.msra.mxu0 %v61
    %593 = vmatpush.msra.mxu0 %v60
    %594 = vmatpush.msra.mxu0 %v59
    %595 = vmatpush.msra.mxu0 %v58
    %596 = vmatpush.msra.mxu0 %v57
    %597 = vmatpush.msra.mxu0 %v56
    %598 = vmatpush.msra.mxu0 %v55
    %599 = vmatpush.msra.mxu0 %v54
    %600 = vmatpush.msra.mxu0 %v53
    %601 = vmatpush.msra.mxu0 %v52
    %602 = vmatmul.f32.gmra.mxu0 %v584
    %v603 = vpop.f32.mrf.mxu0
    %v604 = vadd.f32 0.0, %v603
    %605 = vmatmul.f32.gmra.mxu0 %v585
    %v606 = vpop.f32.mrf.mxu0
    %v607 = vadd.f32 0.0, %v606
    %608 = vdwg.mxu0
    %v609 = vadd.f32 %v486, %v604
    %v610 = vadd.f32 %v487, %v607
    %v611 = vperm.slane %v68, 5
    %v612 = vadd.f32 %v609, %v611
    %v613 = vadd.f32 %v610, %v611
    %s614 = scalar_lea.vmem %s3, 32
    %v615 = vld [vmem:[%s614] sm:$0xff]
    %v616 = vld [vmem:[%s614 + $0x8] sm:$0xff]
    %v617 = vld [vmem:[%s614 + $0x10] sm:$0xff]
    %v618 = vld [vmem:[%s614 + $0x18] sm:$0xff]
    %s619 = scalar_lea.vmem %s4, 32
    %v620 = vld [vmem:[%s619] sm:$0xff]
    %v621 = vld [vmem:[%s619 + $0x8] sm:$0xff]
    %v622 = vld [vmem:[%s619 + $0x10] sm:$0xff]
    %v623 = vld [vmem:[%s619 + $0x18] sm:$0xff]
    %s624 = scalar_lea.vmem %s5, 32
    %v625 = vld [vmem:[%s624] sm:$0xff]
    %v626 = vld [vmem:[%s624 + $0x8] sm:$0xff]
    %v627 = vld [vmem:[%s624 + $0x10] sm:$0xff]
    %v628 = vld [vmem:[%s624 + $0x18] sm:$0xff]
    %s629 = scalar_lea.vmem %s6, 128
    %v630 = vld [vmem:[%s629] sm:$0xff]
    %v631 = vld [vmem:[%s629 + $0x8] sm:$0xff]
    %v632 = vld [vmem:[%s629 + $0x10] sm:$0xff]
    %v633 = vld [vmem:[%s629 + $0x18] sm:$0xff]
    %v634 = vld [vmem:[%s629 + $0x20] sm:$0xff]
    %v635 = vld [vmem:[%s629 + $0x28] sm:$0xff]
    %v636 = vld [vmem:[%s629 + $0x30] sm:$0xff]
    %v637 = vld [vmem:[%s629 + $0x38] sm:$0xff]
    %v638 = vld [vmem:[%s629 + $0x40] sm:$0xff]
    %v639 = vld [vmem:[%s629 + $0x48] sm:$0xff]
    %v640 = vld [vmem:[%s629 + $0x50] sm:$0xff]
    %v641 = vld [vmem:[%s629 + $0x58] sm:$0xff]
    %v642 = vld [vmem:[%s629 + $0x60] sm:$0xff]
    %v643 = vld [vmem:[%s629 + $0x68] sm:$0xff]
    %v644 = vld [vmem:[%s629 + $0x70] sm:$0xff]
    %v645 = vld [vmem:[%s629 + $0x78] sm:$0xff]
    %s646 = scalar_lea.vmem %s7, 8
    %v647 = vld [vmem:[%s646] sm:$0xff]
    %v648 = vsel %vm69, %v612, 0.0
    %649 = vadd.xlane.f32.xlu0 %v648
    %v650 = vpop.xlane.xlu0 %649
    %v651 = vsel %vm69, %v613, 0.0
    %652 = vadd.xlane.f32.xlu0 %v651
    %v653 = vpop.xlane.xlu0 %652
    %v654 = vmul.f32 %v650, %v82
    %v655 = vmul.f32 %v653, %v82
    %v656 = vsub.f32 %v612, %v654
    %v657 = vsub.f32 %v613, %v655
    %v658 = vmul.f32 %v656, %v656
    %v659 = vmul.f32 %v657, %v657
    %v660 = vsel %vm69, %v658, 0.0
    %661 = vadd.xlane.f32.xlu0 %v660
    %v662 = vpop.xlane.xlu0 %661
    %v663 = vsel %vm69, %v659, 0.0
    %664 = vadd.xlane.f32.xlu0 %v663
    %v665 = vpop.xlane.xlu0 %664
    %v666 = vmul.f32 %v662, %v82
    %v667 = vmul.f32 %v665, %v82
    %v668 = vadd.f32 %v666, 1e-05
    %v669 = vadd.f32 %v667, 1e-05
    %v670 = vrsqrt.pop %v668
    %v671 = vmul.f32 %v670, %v668
    %v672 = vmul.f32 %v671, %v670
    %v673 = vmul.f32 0.5, %v672
    %v674 = vsub.f32 1.5, %v673
    %v675 = vmul.f32 %v670, %v674
    %vm676 = vweird.f32 %v668
    %vm677 = vweird.f32 %v670
    %vm678 = vmor %vm676, %vm677
    %v679 = vsel %vm678, %v670, %v675
    %v680 = vrsqrt.pop %v669
    %v681 = vmul.f32 %v680, %v669
    %v682 = vmul.f32 %v681, %v680
    %v683 = vmul.f32 0.5, %v682
    %v684 = vsub.f32 1.5, %v683
    %v685 = vmul.f32 %v680, %v684
    %vm686 = vweird.f32 %v669
    %vm687 = vweird.f32 %v680
    %vm688 = vmor %vm686, %vm687
    %v689 = vsel %vm688, %v680, %v685
    %v690 = vmul.f32 %v656, %v679
    %v691 = vmul.f32 %v657, %v689
    %v692 = vperm.slane %v647, 0
    %v693 = vmul.f32 %v690, %v692
    %v694 = vmul.f32 %v691, %v692
    %v695 = vperm.slane %v647, 1
    %v696 = vadd.f32 %v693, %v695
    %v697 = vadd.f32 %v694, %v695
    %v698 = vperm.slane %v647, 6
    %v700 = vsel %vm69, %v696, 0
    %v703 = vsel %vm69, %v697, 0
    %705 = vmatpush.msra.mxu0 0.0
    %706 = vmatpush.msra.mxu0 0.0
    %707 = vmatpush.msra.mxu0 0.0
    %708 = vmatpush.msra.mxu0 0.0
    %709 = vmatpush.msra.mxu0 0.0
    %710 = vmatpush.msra.mxu0 0.0
    %711 = vmatpush.msra.mxu0 0.0
    %712 = vmatpush.msra.mxu0 0.0
    %713 = vmatpush.msra.mxu0 0.0
    %714 = vmatpush.msra.mxu0 0.0
    %715 = vmatpush.msra.mxu0 0.0
    %716 = vmatpush.msra.mxu0 0.0
    %717 = vmatpush.msra.mxu0 %v618
    %718 = vmatpush.msra.mxu0 %v617
    %719 = vmatpush.msra.mxu0 %v616
    %720 = vmatpush.msra.mxu0 %v615
    %721 = vmatmul.f32.gmra.mxu0 %v700
    %v722 = vpop.f32.mrf.mxu0
    %v723 = vadd.f32 %v698, %v722
    %724 = vmatmul.f32.gmra.mxu0 %v703
    %v725 = vpop.f32.mrf.mxu0
    %v726 = vadd.f32 %v698, %v725
    %727 = vdwg.mxu0
    %729 = vrot.lane.b32.xlu0 %v723, 96
    %v730 = vpop.permute.xlu0 %729
    %v731 = vsel %vm160, %v723, 0
    %v733 = vsel %vm160, %v730, 0
    %735 = vmatpush.xpose.msra.mxu0 0.0
    %736 = vmatpush.xpose.msra.mxu0 0.0
    %737 = vmatpush.xpose.msra.mxu0 0.0
    %738 = vmatpush.xpose.msra.mxu0 0.0
    %739 = vmatpush.xpose.msra.mxu0 0.0
    %740 = vmatpush.xpose.msra.mxu0 0.0
    %741 = vmatpush.xpose.msra.mxu0 0.0
    %742 = vmatpush.xpose.msra.mxu0 0.0
    %743 = vmatpush.xpose.msra.mxu0 0.0
    %744 = vmatpush.xpose.msra.mxu0 0.0
    %745 = vmatpush.xpose.msra.mxu0 0.0
    %746 = vmatpush.xpose.msra.mxu0 0.0
    %747 = vmatpush.xpose.msra.mxu0 0.0
    %748 = vmatpush.xpose.msra.mxu0 0.0
    %749 = vmatpush.xpose.msra.mxu0 0.0
    %750 = vmatpush.xpose.msra.mxu0 %v733
    %751 = vmatmul.f32.gmra.mxu0 %v731
    %v752 = vpop.f32.mrf.mxu0
    %v753 = vadd.f32 0.0, %v752
    %754 = vdwg.mxu0
    %756 = vrot.lane.b32.xlu0 %v726, 96
    %v757 = vpop.permute.xlu0 %756
    %v758 = vsel %vm160, %v726, 0
    %v760 = vsel %vm160, %v757, 0
    %762 = vmatpush.xpose.msra.mxu0 0.0
    %763 = vmatpush.xpose.msra.mxu0 0.0
    %764 = vmatpush.xpose.msra.mxu0 0.0
    %765 = vmatpush.xpose.msra.mxu0 0.0
    %766 = vmatpush.xpose.msra.mxu0 0.0
    %767 = vmatpush.xpose.msra.mxu0 0.0
    %768 = vmatpush.xpose.msra.mxu0 0.0
    %769 = vmatpush.xpose.msra.mxu0 0.0
    %770 = vmatpush.xpose.msra.mxu0 0.0
    %771 = vmatpush.xpose.msra.mxu0 0.0
    %772 = vmatpush.xpose.msra.mxu0 0.0
    %773 = vmatpush.xpose.msra.mxu0 0.0
    %774 = vmatpush.xpose.msra.mxu0 0.0
    %775 = vmatpush.xpose.msra.mxu0 0.0
    %776 = vmatpush.xpose.msra.mxu0 0.0
    %777 = vmatpush.xpose.msra.mxu0 %v760
    %778 = vmatmul.f32.gmra.mxu0 %v758
    %v779 = vpop.f32.mrf.mxu0
    %v780 = vadd.f32 0.0, %v779
    %781 = vdwg.mxu0
    %v782 = vmul.f32 %v753, 0.25
    %v783 = vmul.f32 %v780, 0.25
    %v784 = vadd.f32 %v782, %v38
    %v785 = vadd.f32 %v783, %v39
    %v786 = vsel %vm216, %v784, -inf
    %787 = vmax.xlane.f32.xlu0 %v786
    %v788 = vpop.xlane.xlu0 %787
    %v789 = vsel %vm216, %v785, -inf
    %790 = vmax.xlane.f32.xlu0 %v789
    %v791 = vpop.xlane.xlu0 %790
    %v792 = vsub.f32 %v784, %v788
    %v793 = vsub.f32 %v785, %v791
    %v794 = vmul.f32 %v792, 1.442695
    %v795 = vpow.pop %v794
    %v796 = vmul.f32 %v793, 1.442695
    %v797 = vpow.pop %v796
    %v798 = vsel %vm216, %v795, 0.0
    %799 = vadd.xlane.f32.xlu0 %v798
    %v800 = vpop.xlane.xlu0 %799
    %v801 = vsel %vm216, %v797, 0.0
    %802 = vadd.xlane.f32.xlu0 %v801
    %v803 = vpop.xlane.xlu0 %802
    %v804 = vrcp.pop %v800
    %v805 = vrcp.pop %v803
    %v806 = vmul.f32 %v795, %v804
    %v807 = vmul.f32 %v797, %v805
    %808 = vrot.lane.b32.xlu0 %v723, 64
    %v809 = vpop.permute.xlu0 %808
    %v812 = vsel %vm216, %v806, 0
    %814 = vmatpush.msra.mxu0 0.0
    %815 = vmatpush.msra.mxu0 0.0
    %816 = vmatpush.msra.mxu0 0.0
    %817 = vmatpush.msra.mxu0 0.0
    %818 = vmatpush.msra.mxu0 0.0
    %819 = vmatpush.msra.mxu0 0.0
    %820 = vmatpush.msra.mxu0 0.0
    %821 = vmatpush.msra.mxu0 0.0
    %822 = vmatpush.msra.mxu0 0.0
    %823 = vmatpush.msra.mxu0 0.0
    %824 = vmatpush.msra.mxu0 0.0
    %825 = vmatpush.msra.mxu0 0.0
    %826 = vmatpush.msra.mxu0 0.0
    %827 = vmatpush.msra.mxu0 0.0
    %828 = vmatpush.msra.mxu0 0.0
    %829 = vmatpush.msra.mxu0 %v809
    %830 = vmatmul.f32.gmra.mxu0 %v812
    %v831 = vpop.f32.mrf.mxu0
    %v832 = vadd.f32 0.0, %v831
    %833 = vdwg.mxu0
    %834 = vrot.lane.b32.xlu0 %v726, 64
    %v835 = vpop.permute.xlu0 %834
    %v838 = vsel %vm216, %v807, 0
    %840 = vmatpush.msra.mxu0 0.0
    %841 = vmatpush.msra.mxu0 0.0
    %842 = vmatpush.msra.mxu0 0.0
    %843 = vmatpush.msra.mxu0 0.0
    %844 = vmatpush.msra.mxu0 0.0
    %845 = vmatpush.msra.mxu0 0.0
    %846 = vmatpush.msra.mxu0 0.0
    %847 = vmatpush.msra.mxu0 0.0
    %848 = vmatpush.msra.mxu0 0.0
    %849 = vmatpush.msra.mxu0 0.0
    %850 = vmatpush.msra.mxu0 0.0
    %851 = vmatpush.msra.mxu0 0.0
    %852 = vmatpush.msra.mxu0 0.0
    %853 = vmatpush.msra.mxu0 0.0
    %854 = vmatpush.msra.mxu0 0.0
    %855 = vmatpush.msra.mxu0 %v835
    %856 = vmatmul.f32.gmra.mxu0 %v838
    %v857 = vpop.f32.mrf.mxu0
    %v858 = vadd.f32 0.0, %v857
    %859 = vdwg.mxu0
    %860 = vrot.lane.b32.xlu0 %v723, 112
    %v861 = vpop.permute.xlu0 %860
    %862 = vrot.lane.b32.xlu0 %v723, 80
    %v863 = vpop.permute.xlu0 %862
    %v864 = vsel %vm160, %v861, 0
    %v866 = vsel %vm160, %v863, 0
    %868 = vmatpush.xpose.msra.mxu0 0.0
    %869 = vmatpush.xpose.msra.mxu0 0.0
    %870 = vmatpush.xpose.msra.mxu0 0.0
    %871 = vmatpush.xpose.msra.mxu0 0.0
    %872 = vmatpush.xpose.msra.mxu0 0.0
    %873 = vmatpush.xpose.msra.mxu0 0.0
    %874 = vmatpush.xpose.msra.mxu0 0.0
    %875 = vmatpush.xpose.msra.mxu0 0.0
    %876 = vmatpush.xpose.msra.mxu0 0.0
    %877 = vmatpush.xpose.msra.mxu0 0.0
    %878 = vmatpush.xpose.msra.mxu0 0.0
    %879 = vmatpush.xpose.msra.mxu0 0.0
    %880 = vmatpush.xpose.msra.mxu0 0.0
    %881 = vmatpush.xpose.msra.mxu0 0.0
    %882 = vmatpush.xpose.msra.mxu0 0.0
    %883 = vmatpush.xpose.msra.mxu0 %v866
    %884 = vmatmul.f32.gmra.mxu0 %v864
    %v885 = vpop.f32.mrf.mxu0
    %v886 = vadd.f32 0.0, %v885
    %887 = vdwg.mxu0
    %888 = vrot.lane.b32.xlu0 %v726, 112
    %v889 = vpop.permute.xlu0 %888
    %890 = vrot.lane.b32.xlu0 %v726, 80
    %v891 = vpop.permute.xlu0 %890
    %v892 = vsel %vm160, %v889, 0
    %v894 = vsel %vm160, %v891, 0
    %896 = vmatpush.xpose.msra.mxu0 0.0
    %897 = vmatpush.xpose.msra.mxu0 0.0
    %898 = vmatpush.xpose.msra.mxu0 0.0
    %899 = vmatpush.xpose.msra.mxu0 0.0
    %900 = vmatpush.xpose.msra.mxu0 0.0
    %901 = vmatpush.xpose.msra.mxu0 0.0
    %902 = vmatpush.xpose.msra.mxu0 0.0
    %903 = vmatpush.xpose.msra.mxu0 0.0
    %904 = vmatpush.xpose.msra.mxu0 0.0
    %905 = vmatpush.xpose.msra.mxu0 0.0
    %906 = vmatpush.xpose.msra.mxu0 0.0
    %907 = vmatpush.xpose.msra.mxu0 0.0
    %908 = vmatpush.xpose.msra.mxu0 0.0
    %909 = vmatpush.xpose.msra.mxu0 0.0
    %910 = vmatpush.xpose.msra.mxu0 0.0
    %911 = vmatpush.xpose.msra.mxu0 %v894
    %912 = vmatmul.f32.gmra.mxu0 %v892
    %v913 = vpop.f32.mrf.mxu0
    %v914 = vadd.f32 0.0, %v913
    %915 = vdwg.mxu0
    %v916 = vmul.f32 %v886, 0.25
    %v917 = vmul.f32 %v914, 0.25
    %v918 = vadd.f32 %v916, %v38
    %v919 = vadd.f32 %v917, %v39
    %v920 = vsel %vm216, %v918, -inf
    %921 = vmax.xlane.f32.xlu0 %v920
    %v922 = vpop.xlane.xlu0 %921
    %v923 = vsel %vm216, %v919, -inf
    %924 = vmax.xlane.f32.xlu0 %v923
    %v925 = vpop.xlane.xlu0 %924
    %v926 = vsub.f32 %v918, %v922
    %v927 = vsub.f32 %v919, %v925
    %v928 = vmul.f32 %v926, 1.442695
    %v929 = vpow.pop %v928
    %v930 = vmul.f32 %v927, 1.442695
    %v931 = vpow.pop %v930
    %v932 = vsel %vm216, %v929, 0.0
    %933 = vadd.xlane.f32.xlu0 %v932
    %v934 = vpop.xlane.xlu0 %933
    %v935 = vsel %vm216, %v931, 0.0
    %936 = vadd.xlane.f32.xlu0 %v935
    %v937 = vpop.xlane.xlu0 %936
    %v938 = vrcp.pop %v934
    %v939 = vrcp.pop %v937
    %v940 = vmul.f32 %v929, %v938
    %v941 = vmul.f32 %v931, %v939
    %942 = vrot.lane.b32.xlu0 %v723, 48
    %v943 = vpop.permute.xlu0 %942
    %v946 = vsel %vm216, %v940, 0
    %948 = vmatpush.msra.mxu0 0.0
    %949 = vmatpush.msra.mxu0 0.0
    %950 = vmatpush.msra.mxu0 0.0
    %951 = vmatpush.msra.mxu0 0.0
    %952 = vmatpush.msra.mxu0 0.0
    %953 = vmatpush.msra.mxu0 0.0
    %954 = vmatpush.msra.mxu0 0.0
    %955 = vmatpush.msra.mxu0 0.0
    %956 = vmatpush.msra.mxu0 0.0
    %957 = vmatpush.msra.mxu0 0.0
    %958 = vmatpush.msra.mxu0 0.0
    %959 = vmatpush.msra.mxu0 0.0
    %960 = vmatpush.msra.mxu0 0.0
    %961 = vmatpush.msra.mxu0 0.0
    %962 = vmatpush.msra.mxu0 0.0
    %963 = vmatpush.msra.mxu0 %v943
    %964 = vmatmul.f32.gmra.mxu0 %v946
    %v965 = vpop.f32.mrf.mxu0
    %v966 = vadd.f32 0.0, %v965
    %967 = vdwg.mxu0
    %968 = vrot.lane.b32.xlu0 %v726, 48
    %v969 = vpop.permute.xlu0 %968
    %v972 = vsel %vm216, %v941, 0
    %974 = vmatpush.msra.mxu0 0.0
    %975 = vmatpush.msra.mxu0 0.0
    %976 = vmatpush.msra.mxu0 0.0
    %977 = vmatpush.msra.mxu0 0.0
    %978 = vmatpush.msra.mxu0 0.0
    %979 = vmatpush.msra.mxu0 0.0
    %980 = vmatpush.msra.mxu0 0.0
    %981 = vmatpush.msra.mxu0 0.0
    %982 = vmatpush.msra.mxu0 0.0
    %983 = vmatpush.msra.mxu0 0.0
    %984 = vmatpush.msra.mxu0 0.0
    %985 = vmatpush.msra.mxu0 0.0
    %986 = vmatpush.msra.mxu0 0.0
    %987 = vmatpush.msra.mxu0 0.0
    %988 = vmatpush.msra.mxu0 0.0
    %989 = vmatpush.msra.mxu0 %v969
    %990 = vmatmul.f32.gmra.mxu0 %v972
    %v991 = vpop.f32.mrf.mxu0
    %v992 = vadd.f32 0.0, %v991
    %993 = vdwg.mxu0
    %v995 = vsel %vm160, %v966, 0
    %v998 = vsel %vm160, %v992, 0
    %1000 = vmatpush.msra.mxu0 0.0
    %1001 = vmatpush.msra.mxu0 0.0
    %1002 = vmatpush.msra.mxu0 0.0
    %1003 = vmatpush.msra.mxu0 0.0
    %1004 = vmatpush.msra.mxu0 0.0
    %1005 = vmatpush.msra.mxu0 0.0
    %1006 = vmatpush.msra.mxu0 0.0
    %1007 = vmatpush.msra.mxu0 0.0
    %1008 = vmatpush.msra.mxu0 0.0
    %1009 = vmatpush.msra.mxu0 0.0
    %1010 = vmatpush.msra.mxu0 0.0
    %1011 = vmatpush.msra.mxu0 0.0
    %1012 = vmatpush.msra.mxu0 0.0
    %1013 = vmatpush.msra.mxu0 0.0
    %1014 = vmatpush.msra.mxu0 %v623
    %1015 = vmatpush.msra.mxu0 %v622
    %1016 = vmatmul.f32.gmra.mxu0 %v995
    %v1017 = vpop.f32.mrf.mxu0
    %v1018 = vadd.f32 0.0, %v1017
    %1019 = vmatmul.f32.gmra.mxu0 %v998
    %v1020 = vpop.f32.mrf.mxu0
    %v1021 = vadd.f32 0.0, %v1020
    %1022 = vdwg.mxu0
    %v1024 = vsel %vm160, %v832, 0
    %v1027 = vsel %vm160, %v858, 0
    %1029 = vmatpush.msra.mxu0 0.0
    %1030 = vmatpush.msra.mxu0 0.0
    %1031 = vmatpush.msra.mxu0 0.0
    %1032 = vmatpush.msra.mxu0 0.0
    %1033 = vmatpush.msra.mxu0 0.0
    %1034 = vmatpush.msra.mxu0 0.0
    %1035 = vmatpush.msra.mxu0 0.0
    %1036 = vmatpush.msra.mxu0 0.0
    %1037 = vmatpush.msra.mxu0 0.0
    %1038 = vmatpush.msra.mxu0 0.0
    %1039 = vmatpush.msra.mxu0 0.0
    %1040 = vmatpush.msra.mxu0 0.0
    %1041 = vmatpush.msra.mxu0 0.0
    %1042 = vmatpush.msra.mxu0 0.0
    %1043 = vmatpush.msra.mxu0 %v621
    %1044 = vmatpush.msra.mxu0 %v620
    %1045 = vmatmul.f32.gmra.mxu0 %v1024
    %v1046 = vpop.f32.mrf.mxu0
    %v1047 = vadd.f32 %v1018, %v1046
    %1048 = vmatmul.f32.gmra.mxu0 %v1027
    %v1049 = vpop.f32.mrf.mxu0
    %v1050 = vadd.f32 %v1021, %v1049
    %1051 = vdwg.mxu0
    %v1052 = vadd.f32 %v612, %v1047
    %v1053 = vadd.f32 %v613, %v1050
    %v1054 = vperm.slane %v647, 4
    %v1055 = vadd.f32 %v1052, %v1054
    %v1056 = vadd.f32 %v1053, %v1054
    %v1057 = vsel %vm69, %v1055, 0.0
    %1058 = vadd.xlane.f32.xlu0 %v1057
    %v1059 = vpop.xlane.xlu0 %1058
    %v1060 = vsel %vm69, %v1056, 0.0
    %1061 = vadd.xlane.f32.xlu0 %v1060
    %v1062 = vpop.xlane.xlu0 %1061
    %v1063 = vmul.f32 %v1059, %v82
    %v1064 = vmul.f32 %v1062, %v82
    %v1065 = vsub.f32 %v1055, %v1063
    %v1066 = vsub.f32 %v1056, %v1064
    %v1067 = vmul.f32 %v1065, %v1065
    %v1068 = vmul.f32 %v1066, %v1066
    %v1069 = vsel %vm69, %v1067, 0.0
    %1070 = vadd.xlane.f32.xlu0 %v1069
    %v1071 = vpop.xlane.xlu0 %1070
    %v1072 = vsel %vm69, %v1068, 0.0
    %1073 = vadd.xlane.f32.xlu0 %v1072
    %v1074 = vpop.xlane.xlu0 %1073
    %v1075 = vmul.f32 %v1071, %v82
    %v1076 = vmul.f32 %v1074, %v82
    %v1077 = vadd.f32 %v1075, 1e-05
    %v1078 = vadd.f32 %v1076, 1e-05
    %v1079 = vrsqrt.pop %v1077
    %v1080 = vmul.f32 %v1079, %v1077
    %v1081 = vmul.f32 %v1080, %v1079
    %v1082 = vmul.f32 0.5, %v1081
    %v1083 = vsub.f32 1.5, %v1082
    %v1084 = vmul.f32 %v1079, %v1083
    %vm1085 = vweird.f32 %v1077
    %vm1086 = vweird.f32 %v1079
    %vm1087 = vmor %vm1085, %vm1086
    %v1088 = vsel %vm1087, %v1079, %v1084
    %v1089 = vrsqrt.pop %v1078
    %v1090 = vmul.f32 %v1089, %v1078
    %v1091 = vmul.f32 %v1090, %v1089
    %v1092 = vmul.f32 0.5, %v1091
    %v1093 = vsub.f32 1.5, %v1092
    %v1094 = vmul.f32 %v1089, %v1093
    %vm1095 = vweird.f32 %v1078
    %vm1096 = vweird.f32 %v1089
    %vm1097 = vmor %vm1095, %vm1096
    %v1098 = vsel %vm1097, %v1089, %v1094
    %v1099 = vmul.f32 %v1065, %v1088
    %v1100 = vmul.f32 %v1066, %v1098
    %v1101 = vperm.slane %v647, 2
    %v1102 = vmul.f32 %v1099, %v1101
    %v1103 = vmul.f32 %v1100, %v1101
    %v1104 = vperm.slane %v647, 3
    %v1105 = vadd.f32 %v1102, %v1104
    %v1106 = vadd.f32 %v1103, %v1104
    %v1107 = vperm.slane %v647, 7
    %v1109 = vsel %vm69, %v1105, 0
    %v1112 = vsel %vm69, %v1106, 0
    %1114 = vmatpush.msra.mxu0 0.0
    %1115 = vmatpush.msra.mxu0 0.0
    %1116 = vmatpush.msra.mxu0 0.0
    %1117 = vmatpush.msra.mxu0 0.0
    %1118 = vmatpush.msra.mxu0 0.0
    %1119 = vmatpush.msra.mxu0 0.0
    %1120 = vmatpush.msra.mxu0 0.0
    %1121 = vmatpush.msra.mxu0 0.0
    %1122 = vmatpush.msra.mxu0 0.0
    %1123 = vmatpush.msra.mxu0 0.0
    %1124 = vmatpush.msra.mxu0 0.0
    %1125 = vmatpush.msra.mxu0 0.0
    %1126 = vmatpush.msra.mxu0 %v628
    %1127 = vmatpush.msra.mxu0 %v627
    %1128 = vmatpush.msra.mxu0 %v626
    %1129 = vmatpush.msra.mxu0 %v625
    %1130 = vmatmul.f32.gmra.mxu0 %v1109
    %v1131 = vpop.f32.mrf.mxu0
    %v1132 = vadd.f32 %v1107, %v1131
    %1133 = vmatmul.f32.gmra.mxu0 %v1112
    %v1134 = vpop.f32.mrf.mxu0
    %v1135 = vadd.f32 %v1107, %v1134
    %1136 = vdwg.mxu0
    %v1137 = vmul.f32 %v1132, 0.5
    %v1138 = vmul.f32 %v1135, 0.5
    %v1139 = vmul.f32 %v1132, %v1132
    %v1140 = vmul.f32 %v1135, %v1135
    %v1141 = vmul.f32 %v1132, %v1139
    %v1142 = vmul.f32 %v1135, %v1140
    %v1143 = vmul.f32 %v1141, 0.044715
    %v1144 = vmul.f32 %v1142, 0.044715
    %v1145 = vadd.f32 %v1132, %v1143
    %v1146 = vadd.f32 %v1135, %v1144
    %v1147 = vmul.f32 %v1145, 0.7978846
    %v1148 = vmul.f32 %v1146, 0.7978846
    %v1149 = vtanh.pop %v1147
    %v1150 = vtanh.pop %v1148
    %v1151 = vadd.f32 %v1149, 1.0
    %v1152 = vadd.f32 %v1150, 1.0
    %v1153 = vmul.f32 %v1137, %v1151
    %v1154 = vmul.f32 %v1138, %v1152
    %1155 = vmatpush.msra.mxu0 %v645
    %1156 = vmatpush.msra.mxu0 %v644
    %1157 = vmatpush.msra.mxu0 %v643
    %1158 = vmatpush.msra.mxu0 %v642
    %1159 = vmatpush.msra.mxu0 %v641
    %1160 = vmatpush.msra.mxu0 %v640
    %1161 = vmatpush.msra.mxu0 %v639
    %1162 = vmatpush.msra.mxu0 %v638
    %1163 = vmatpush.msra.mxu0 %v637
    %1164 = vmatpush.msra.mxu0 %v636
    %1165 = vmatpush.msra.mxu0 %v635
    %1166 = vmatpush.msra.mxu0 %v634
    %1167 = vmatpush.msra.mxu0 %v633
    %1168 = vmatpush.msra.mxu0 %v632
    %1169 = vmatpush.msra.mxu0 %v631
    %1170 = vmatpush.msra.mxu0 %v630
    %1171 = vmatmul.f32.gmra.mxu0 %v1153
    %v1172 = vpop.f32.mrf.mxu0
    %v1173 = vadd.f32 0.0, %v1172
    %1174 = vmatmul.f32.gmra.mxu0 %v1154
    %v1175 = vpop.f32.mrf.mxu0
    %v1176 = vadd.f32 0.0, %v1175
    %1177 = vdwg.mxu0
    %v1178 = vadd.f32 %v1055, %v1173
    %v1179 = vadd.f32 %v1056, %v1176
    %v1180 = vperm.slane %v647, 5
    %v1181 = vadd.f32 %v1178, %v1180
    %v1182 = vadd.f32 %v1179, %v1180
    %v1183 = vld [vmem:[%s8] sm:$0x3]
    %v1184 = vsel %vm69, %v1181, 0.0
    %1185 = vadd.xlane.f32.xlu0 %v1184
    %v1186 = vpop.xlane.xlu0 %1185
    %v1187 = vsel %vm69, %v1182, 0.0
    %1188 = vadd.xlane.f32.xlu0 %v1187
    %v1189 = vpop.xlane.xlu0 %1188
    %v1190 = vmul.f32 %v1186, %v82
    %v1191 = vmul.f32 %v1189, %v82
    %v1192 = vsub.f32 %v1181, %v1190
    %v1193 = vsub.f32 %v1182, %v1191
    %v1194 = vmul.f32 %v1192, %v1192
    %v1195 = vmul.f32 %v1193, %v1193
    %v1196 = vsel %vm69, %v1194, 0.0
    %1197 = vadd.xlane.f32.xlu0 %v1196
    %v1198 = vpop.xlane.xlu0 %1197
    %v1199 = vsel %vm69, %v1195, 0.0
    %1200 = vadd.xlane.f32.xlu0 %v1199
    %v1201 = vpop.xlane.xlu0 %1200
    %v1202 = vmul.f32 %v1198, %v82
    %v1203 = vmul.f32 %v1201, %v82
    %v1204 = vadd.f32 %v1202, 1e-05
    %v1205 = vadd.f32 %v1203, 1e-05
    %v1206 = vrsqrt.pop %v1204
    %v1207 = vmul.f32 %v1206, %v1204
    %v1208 = vmul.f32 %v1207, %v1206
    %v1209 = vmul.f32 0.5, %v1208
    %v1210 = vsub.f32 1.5, %v1209
    %v1211 = vmul.f32 %v1206, %v1210
    %vm1212 = vweird.f32 %v1204
    %vm1213 = vweird.f32 %v1206
    %vm1214 = vmor %vm1212, %vm1213
    %v1215 = vsel %vm1214, %v1206, %v1211
    %v1216 = vrsqrt.pop %v1205
    %v1217 = vmul.f32 %v1216, %v1205
    %v1218 = vmul.f32 %v1217, %v1216
    %v1219 = vmul.f32 0.5, %v1218
    %v1220 = vsub.f32 1.5, %v1219
    %v1221 = vmul.f32 %v1216, %v1220
    %vm1222 = vweird.f32 %v1205
    %vm1223 = vweird.f32 %v1216
    %vm1224 = vmor %vm1222, %vm1223
    %v1225 = vsel %vm1224, %v1216, %v1221
    %v1226 = vmul.f32 %v1192, %v1215
    %v1227 = vmul.f32 %v1193, %v1225
    %v1228 = vperm.slane %v1183, 0
    %v1229 = vmul.f32 %v1226, %v1228
    %v1230 = vmul.f32 %v1227, %v1228
    %v1231 = vperm.slane %v1183, 1
    %v1232 = vadd.f32 %v1229, %v1231
    %v1233 = vadd.f32 %v1230, %v1231
    %v1234 = vld [vmem:[%s9] sm:$0xff]
    %v1235 = vld [vmem:[%s9 + $0x8] sm:$0xff]
    %v1236 = vld [vmem:[%s9 + $0x10] sm:$0xff]
    %v1237 = vld [vmem:[%s9 + $0x18] sm:$0xff]
    %v1239 = vsel %vm69, %v1232, 0
    %v1242 = vsel %vm69, %v1233, 0
    %1244 = vmatpush.msra.mxu0 0.0
    %1245 = vmatpush.msra.mxu0 0.0
    %1246 = vmatpush.msra.mxu0 0.0
    %1247 = vmatpush.msra.mxu0 0.0
    %1248 = vmatpush.msra.mxu0 0.0
    %1249 = vmatpush.msra.mxu0 0.0
    %1250 = vmatpush.msra.mxu0 0.0
    %1251 = vmatpush.msra.mxu0 0.0
    %1252 = vmatpush.msra.mxu0 0.0
    %1253 = vmatpush.msra.mxu0 0.0
    %1254 = vmatpush.msra.mxu0 0.0
    %1255 = vmatpush.msra.mxu0 0.0
    %1256 = vmatpush.msra.mxu0 %v1237
    %1257 = vmatpush.msra.mxu0 %v1236
    %1258 = vmatpush.msra.mxu0 %v1235
    %1259 = vmatpush.msra.mxu0 %v1234
    %1260 = vmatmul.f32.gmra.mxu0 %v1239
    %v1261 = vpop.f32.mrf.mxu0
    %v1262 = vadd.f32 0.0, %v1261
    %1263 = vmatmul.f32.gmra.mxu0 %v1242
    %v1264 = vpop.f32.mrf.mxu0
    %v1265 = vadd.f32 0.0, %v1264
    %1266 = vdwg.mxu0
    %1267 = vmax.xlane.f32.xlu0 %v1262
    %v1268 = vpop.xlane.xlu0 %1267
    %1269 = vmax.xlane.f32.xlu0 %v1265
    %v1270 = vpop.xlane.xlu0 %1269
    %v1271 = vsub.f32 %v1262, %v1268
    %v1272 = vsub.f32 %v1265, %v1270
    %v1273 = vmul.f32 %v1271, 1.442695
    %v1274 = vpow.pop %v1273
    %v1275 = vmul.f32 %v1272, 1.442695
    %v1276 = vpow.pop %v1275
    %1277 = vadd.xlane.f32.xlu0 %v1274
    %v1278 = vpop.xlane.xlu0 %1277
    %1279 = vadd.xlane.f32.xlu0 %v1276
    %v1280 = vpop.xlane.xlu0 %1279
    %v1281 = vlog2.pop %v1278
    %v1282 = vmul.f32 %v1281, 0.6931472
    %v1283 = vlog2.pop %v1280
    %v1284 = vmul.f32 %v1283, 0.6931472
    %v1285 = vadd.f32 %v1268, %v1282
    %v1286 = vadd.f32 %v1270, %v1284
    %v1287 = vld [vmem:[%s2] sm:$0xff]
    %v1288 = vld [vmem:[%s2 + $0x8] sm:$0xff]
    %vm1289 = vcmp.ge.s32.totalorder %v1287, 0
    %vm1290 = vcmp.ge.s32.totalorder %v1288, 0
    %v1291 = vsel %vm1289, 1, 0
    %v1292 = vsel %vm1290, 1, 0
    %v1293 = vcvt.s32.f32 %v1291
    %v1294 = vcvt.s32.f32 %v1292
    %v1295 = vlaneseq
    %v1296 = vand.u32 %v1295, 127
    %1297 = vset.pattern.permute.xlu0 0
    %1298 = vperm.xlu0 %1297, %v1287
    %v1299 = vpop.permute.xlu0 %1298
    %1300 = vset.pattern.permute.xlu0 0
    %1301 = vperm.xlu0 %1300, %v1288
    %v1302 = vpop.permute.xlu0 %1301
    %vm1303 = vcmp.eq.s32.totalorder %v1296, %v1299
    %vm1304 = vcmp.eq.s32.totalorder %v1296, %v1302
    %v1305 = vsel %vm1303, 1, 0
    %v1306 = vsel %vm1304, 1, 0
    %v1307 = vcvt.s32.f32 %v1305
    %v1308 = vcvt.s32.f32 %v1306
    %v1309 = vmul.f32 %v1262, %v1307
    %v1310 = vmul.f32 %v1265, %v1308
    %1311 = vadd.xlane.f32.xlu0 %v1309
    %v1312 = vpop.xlane.xlu0 %1311
    %1313 = vadd.xlane.f32.xlu0 %v1310
    %v1314 = vpop.xlane.xlu0 %1313
    %v1315 = vsub.f32 %v1285, %v1312
    %v1316 = vsub.f32 %v1286, %v1314
    %v1317 = vmul.f32 %v1315, %v1293
    %v1318 = vmul.f32 %v1316, %v1294
    %vm1319 = vcmask 7168
    %v1320 = vsel %vm1319, %v1317, 0.0
    %v1321 = vsel %vm1319, %v1318, 0.0
    %v1322 = vadd.f32 %v1320, %v1321
    %1323 = vadd.xlane.f32.xlu0 %v1322
    %v1324 = vpop.xlane.xlu0 %1323
    %v1325 = vrot.slane %v1324, 4
    %v1326 = vadd.f32 %v1324, %v1325
    %v1327 = vrot.slane %v1326, 2
    %v1328 = vadd.f32 %v1326, %v1327
    %v1329 = vrot.slane %v1328, 1
    %v1330 = vadd.f32 %v1328, %v1329
    %s1331 = vtos %v1330
    %v1332 = vstv %s1331
    %v1333 = vmul.f32 %v1332, 0.071428575
    %v1334 = vmul.f32 %v1333, 1.442695
    %v1335 = vpow.pop %v1334
    %vm1336 = vcmask 0
    %1337 = vst.msk [vmem:[#allocation2] sm:$0x1] %vm1336, %v1335
    // Predicated region
    $region42: #{tpu_custom_call.1} parent=1 // pred_check
      _
    $region43: #{tpu_custom_call.1} parent=1 // pred_check_branch
      %1339 = sbr.rel (0) target = $region45
    $region44: #{tpu_custom_call.1} parent=1 // pred_region
      %1341 = vsyncadd [#allocation3], 0
      %s1343 = sshll.u32 [#allocation2], 4
      %s1344 = int_to_ptr.vmem [resolvable:$true] %s1343
      %s1345 = sshll.u32 %s10, 4
      %s1346 = int_to_ptr.hbm [resolvable:$true] %s1345
      %1348 = dma.vmem_to_hbm [thread:$0]  %s1344, 16, %s1346, [#allocation3]
    $region45: #{tpu_custom_call.1} parent=1 // pred_fallthru
      _
    // Predicated region
    $region46: #{tpu_custom_call.1} parent=1 // pred_check
      _
    $region47: #{tpu_custom_call.1} parent=1 // pred_check_branch
      %1350 = sbr.rel (0) target = $region49
    $region48: #{tpu_custom_call.1} parent=1 // pred_region
      %1352 = dma.done [#allocation3], 16
    $region49: #{tpu_custom_call.1} parent=1 // pred_fallthru
      _
    %1353 = vsyncpa [#allocation3], 1

</llo_original>
